<compile_context>
chip_gen: v5e
topology: v5e:2x2
jax: 0.10.0
libtpu: 0.0.40
codegen_flags: <defaults>
</compile_context>

<pallas_src>
import functools
import math

import jax
import jax.numpy as jnp
from jax.experimental import pallas as pl
from jax.experimental.pallas import tpu as pltpu


_VMEM_LIMIT_BYTES = 48 * 1024 * 1024    # safe on v5e/v6e (128 MiB) and v7x (64 MiB)
_RESIDENT_BYTES_CAP = 8 * 1024 * 1024   # max bf16 operand kept fully VMEM-resident


def _round_up(v, m):
    return (v + m - 1) // m * m


def _pick_tiles(n_nodes, tm_req, tk_req):
    """Lane/sublane-friendly (tm, tk) and padded node count n_p."""
    n128 = _round_up(max(n_nodes, 1), 128)
    tm = max(128, min(tm_req, n128))
    if n128 >= 256:
        # Keep >= 2 row tiles so the "parallel" axis can shard across cores.
        tm = min(tm, (n128 // 2) // 128 * 128)
    tk = max(128, min(tk_req, n128))
    unit = tm * tk // math.gcd(tm, tk)
    n_p = _round_up(n_nodes, unit)
    return tm, tk, n_p


# --------------------------------------------------------------- kernels ---

def _proj_kernel(x_ref, w_ref, o_ref):
    """o = x @ w (row tile of node features; weight resident; bf16 MXU path)."""
    o_ref[...] = jnp.dot(
        x_ref[...], w_ref[...], preferred_element_type=jnp.float32
    ).astype(o_ref.dtype)


def _agg_step(adj_ref, h_ref, acc_ref):
    """acc += adj_tile @ h_tile.

    h_ref is either the streamed (tk, F) tile or the fully VMEM-resident
    (n_p, F) operand; in the resident case the current k-tile is sliced out
    in-VMEM (no per-row-tile HBM re-streaming).
    """
    tk = adj_ref.shape[1]
    if h_ref.shape[0] == tk:            # streamed tile (or n_k == 1)
        h_tile = h_ref[...]
    else:                               # resident full operand -> slice k tile
        start = pl.multiple_of(pl.program_id(1) * tk, tk)
        h_tile = h_ref[pl.ds(start, tk), :]
    acc_ref[...] += jnp.dot(adj_ref[...], h_tile,
                            preferred_element_type=jnp.float32)


def _agg_relu_proj_kernel(adj_ref, h_ref, w2_ref, o_ref, acc_ref):
    """o = relu(A @ h) @ w2, tiled over (row tiles i, reduction tiles k)."""
    k = pl.program_id(1)

    @pl.when(k == 0)
    def _():
        acc_ref[...] = jnp.zeros_like(acc_ref)

    _agg_step(adj_ref, h_ref, acc_ref)

    @pl.when(k == pl.num_programs(1) - 1)
    def _():
        h1 = jnp.maximum(acc_ref[...], 0.0).astype(w2_ref.dtype)  # bf16 MXU input
        o_ref[...] = jnp.dot(
            h1, w2_ref[...], preferred_element_type=jnp.float32
        ).astype(o_ref.dtype)


def _agg_logsoftmax_kernel(adj_ref, h_ref, o_ref, acc_ref, *, valid_cols):
    """o = log_softmax(A @ h) over the first `valid_cols` (un-padded) columns."""
    k = pl.program_id(1)

    @pl.when(k == 0)
    def _():
        acc_ref[...] = jnp.zeros_like(acc_ref)

    _agg_step(adj_ref, h_ref, acc_ref)

    @pl.when(k == pl.num_programs(1) - 1)
    def _():
        logits = acc_ref[...]
        # Mask padded feature columns so they do not affect max / logsumexp.
        col = jax.lax.broadcasted_iota(jnp.int32, logits.shape, 1)
        logits = jnp.where(col < valid_cols, logits, jnp.float32(-1e30))
        m = jnp.max(logits, axis=1, keepdims=True)
        shifted = logits - m
        lse = jnp.log(jnp.sum(jnp.exp(shifted), axis=1, keepdims=True))
        o_ref[...] = (shifted - lse).astype(o_ref.dtype)


# --------------------------------------------------------------- wrapper ---

def prepare_adjacency(adjacency, *, tm=512, tk=512):
    """Pad the dense adjacency to the tiled node count and cast to bf16.

    Call once and reuse across forwards: the f32->bf16 cast + pad of the
    [N, N] matrix is itself a full HBM pass and must not sit in the hot path.
    """
    n = adjacency.shape[0]
    _, _, n_p = _pick_tiles(n, tm, tk)
    pad = n_p - n
    return jnp.pad(adjacency.astype(jnp.bfloat16), ((0, pad), (0, pad)))


@functools.partial(jax.jit, static_argnames=("tm", "tk"))
def mlpgnn_forward(x, adj_p, w1, w2, *, tm=512, tk=512):
    """x: [N, dim_in]; adj_p: pre-padded bf16 [n_p, n_p] from prepare_adjacency;
       w1: [dim_in, dim_h], w2: [dim_h, dim_out] (Linear weights as [in, out])."""
    N, dim_in = x.shape
    dim_h = w1.shape[1]
    dim_out = w2.shape[1]

    tm, tk, n_p = _pick_tiles(N, tm, tk)
    din_p = _round_up(dim_in, 128)
    dh_p = _round_up(dim_h, 128)
    dout_p = _round_up(dim_out, 128)

    if adj_p.shape != (n_p, n_p) or adj_p.dtype != jnp.bfloat16:
        # Fallback (slow path): prefer prepare_adjacency() outside the forward.
        adj_p = jnp.pad(adj_p.astype(jnp.bfloat16),
                        ((0, n_p - adj_p.shape[0]), (0, n_p - adj_p.shape[1])))

    # Small operands: bf16 + zero-pad to lane-dense multiples of 128.
    x_p = jnp.pad(x.astype(jnp.bfloat16), ((0, n_p - N), (0, din_p - dim_in)))
    w1_p = jnp.pad(w1.astype(jnp.bfloat16),
                   ((0, din_p - dim_in), (0, dh_p - dim_h)))
    w2_p = jnp.pad(w2.astype(jnp.bfloat16),
                   ((0, dh_p - dim_h), (0, dout_p - dim_out)))

    n_i = n_p // tm
    n_k = n_p // tk

    cp_row = pltpu.CompilerParams(dimension_semantics=("parallel",),
                                  vmem_limit_bytes=_VMEM_LIMIT_BYTES)
    cp_agg = pltpu.CompilerParams(dimension_semantics=("parallel", "arbitrary"),
                                  vmem_limit_bytes=_VMEM_LIMIT_BYTES)

    # ---- stage 0: XW1 = X @ W1 (row-tiled; bf16 in, f32 acc, bf16 out) -----
    xw1 = pl.pallas_call(
        _proj_kernel,
        out_shape=jax.ShapeDtypeStruct((n_p, dh_p), jnp.bfloat16),
        grid_spec=pltpu.PrefetchScalarGridSpec(
            num_scalar_prefetch=0,
            grid=(n_i,),
            in_specs=[
                pl.BlockSpec((tm, din_p), lambda i: (i, 0)),
                pl.BlockSpec((din_p, dh_p), lambda i: (0, 0)),
            ],
            out_specs=pl.BlockSpec((tm, dh_p), lambda i: (i, 0)),
        ),
        compiler_params=cp_row,
        cost_estimate=pl.CostEstimate(
            flops=2 * n_p * din_p * dh_p,
            transcendentals=0,
            bytes_accessed=2 * (n_p * din_p + din_p * dh_p + n_p * dh_p)),
    )(x_p, w1_p)

    # ---- stage 1: HW2 = relu(A @ XW1) @ W2 ----------------------------------
    xw1_resident = (n_p * dh_p * 2) <= _RESIDENT_BYTES_CAP
    xw1_spec = (pl.BlockSpec((n_p, dh_p), lambda i, k: (0, 0)) if xw1_resident
                else pl.BlockSpec((tk, dh_p), lambda i, k: (k, 0)))
    xw1_reads = 1 if xw1_resident else n_i
    hw2 = pl.pallas_call(
        _agg_relu_proj_kernel,
        out_shape=jax.ShapeDtypeStruct((n_p, dout_p), jnp.bfloat16),
        grid_spec=pltpu.PrefetchScalarGridSpec(
            num_scalar_prefetch=0,
            grid=(n_i, n_k),
            in_specs=[
                pl.BlockSpec((tm, tk), lambda i, k: (i, k)),        # adj: streamed
                xw1_spec,                                           # XW1: resident
                pl.BlockSpec((dh_p, dout_p), lambda i, k: (0, 0)),  # W2: resident
            ],
            out_specs=pl.BlockSpec((tm, dout_p), lambda i, k: (i, 0)),
            scratch_shapes=[pltpu.VMEM((tm, dh_p), jnp.float32)],
        ),
        compiler_params=cp_agg,
        cost_estimate=pl.CostEstimate(
            flops=2 * n_p * n_p * dh_p + 2 * n_p * dh_p * dout_p,
            transcendentals=0,
            bytes_accessed=(2 * n_p * n_p + 2 * n_p * dh_p * xw1_reads
                            + 2 * dh_p * dout_p + 2 * n_p * dout_p)),
    )(adj_p, xw1, w2_p)

    # ---- stage 2: OUT = log_softmax(A @ HW2) --------------------------------
    hw2_resident = (n_p * dout_p * 2) <= _RESIDENT_BYTES_CAP
    hw2_spec = (pl.BlockSpec((n_p, dout_p), lambda i, k: (0, 0)) if hw2_resident
                else pl.BlockSpec((tk, dout_p), lambda i, k: (k, 0)))
    hw2_reads = 1 if hw2_resident else n_i
    out_p = pl.pallas_call(
        functools.partial(_agg_logsoftmax_kernel, valid_cols=dim_out),
        out_shape=jax.ShapeDtypeStruct((n_p, dout_p), jnp.float32),
        grid_spec=pltpu.PrefetchScalarGridSpec(
            num_scalar_prefetch=0,
            grid=(n_i, n_k),
            in_specs=[
                pl.BlockSpec((tm, tk), lambda i, k: (i, k)),  # adj: streamed
                hw2_spec,                                     # HW2: resident
            ],
            out_specs=pl.BlockSpec((tm, dout_p), lambda i, k: (i, 0)),
            scratch_shapes=[pltpu.VMEM((tm, dout_p), jnp.float32)],
        ),
        compiler_params=cp_agg,
        cost_estimate=pl.CostEstimate(
            flops=2 * n_p * n_p * dout_p,
            transcendentals=n_p * dout_p,
            bytes_accessed=(2 * n_p * n_p + 2 * n_p * dout_p * hw2_reads
                            + 4 * n_p * dout_p)),
    )(adj_p, hw2)

    # Slice away node/feature padding (lane-dense [*, 128] stores inside).
    return out_p[:N, :dim_out]


def mlpgnn_reference(x, adjacency, w1, w2):
    h = adjacency @ (x @ w1)
    h = jnp.maximum(h, 0.0)
    h = adjacency @ (h @ w2)
    return jax.nn.log_softmax(h, axis=1)


if __name__ == "__main__":
    key = jax.random.PRNGKey(0)
    k_x, k_a, k_w1, k_w2 = jax.random.split(key, 4)

    N = 200          # nodes (exercises padding and a 2-tile "parallel" row axis)
    dim_in = 16
    dim_h = 32
    dim_out = 8

    x = jax.random.normal(k_x, (N, dim_in), dtype=jnp.float32)

    # Deterministic sparse-ish adjacency stored dense, row-normalized
    # (torch.sparse.mm(adjacency, x) == dense adjacency @ x for a dense operand).
    adj_raw = (jax.random.uniform(k_a, (N, N)) < 0.1).astype(jnp.float32)
    adj = adj_raw + jnp.eye(N, dtype=jnp.float32)
    adj = adj / jnp.sum(adj, axis=1, keepdims=True)

    # Linear(dim_in, dim_out, bias=False) weights, stored as [in, out] (= W.T).
    bound1 = 1.0 / (dim_in ** 0.5)
    bound2 = 1.0 / (dim_h ** 0.5)
    w1 = jax.random.uniform(k_w1, (dim_in, dim_h), minval=-bound1, maxval=bound1,
                            dtype=jnp.float32)
    w2 = jax.random.uniform(k_w2, (dim_h, dim_out), minval=-bound2, maxval=bound2,
                            dtype=jnp.float32)

    # Hoisted out of the hot path: pad + bf16-cast the adjacency once, reuse.
    adj_p = prepare_adjacency(adj)

    out = mlpgnn_forward(x, adj_p, w1, w2)
    out = jax.block_until_ready(out)

    ref = mlpgnn_reference(x, adj, w1, w2)
    assert out.shape == (N, dim_out)
    # bf16 MXU operands (adjacency / activations / weights) -> loose tolerance.
    assert jnp.allclose(out, ref, atol=5e-2, rtol=5e-2), "mismatch vs reference"

    print("KERNEL_OK")
</pallas_src>

<mosaic_0001>
module attributes {stable_mosaic.version = 11 : i64} {
  func.func @_proj_kernel(%arg0: i32, %arg1: memref<128x128xbf16, #tpu.memory_space<vmem>>, %arg2: memref<128x128xbf16, #tpu.memory_space<vmem>>, %arg3: memref<128x128xbf16, #tpu.memory_space<vmem>>) attributes {dimension_semantics = [#tpu.dimension_semantics<parallel>], iteration_bounds = array<i64: 2>, scalar_prefetch = 0 : i64, scratch_operands = 0 : i64, tpu.core_type = #tpu.core_type<tc>, window_params = [{transform_indices = @transform_0, window_bounds = array<i64: 128, 128>}, {pipeline_mode = #tpu.pipeline_mode<synchronous>, transform_indices = @transform_1, window_bounds = array<i64: 128, 128>}, {transform_indices = @transform_2, window_bounds = array<i64: 128, 128>}]} {
    %c0 = arith.constant 0 : index
    %c0_0 = arith.constant 0 : index
    %0 = vector.load %arg1[%c0, %c0_0] : memref<128x128xbf16, #tpu.memory_space<vmem>>, vector<128x128xbf16>
    %c0_1 = arith.constant 0 : index
    %c0_2 = arith.constant 0 : index
    %1 = vector.load %arg2[%c0_1, %c0_2] : memref<128x128xbf16, #tpu.memory_space<vmem>>, vector<128x128xbf16>
    %cst = arith.constant dense<0.000000e+00> : vector<128x128xf32>
    %2 = tpu.matmul %0, %1, %cst {dimension_numbers = #tpu.dot_dimension_numbers<[1], [0], [0], [1], [0, 0, 1, 1], [], []>} : vector<128x128xbf16>, vector<128x128xbf16>, vector<128x128xf32> -> vector<128x128xf32>
    %3 = arith.truncf %2 : vector<128x128xf32> to vector<128x128xbf16>
    %c0_3 = arith.constant 0 : index
    %c0_4 = arith.constant 0 : index
    %4 = vector.load %arg3[%c0_3, %c0_4] : memref<128x128xbf16, #tpu.memory_space<vmem>>, vector<128x128xbf16>
    tpu.vector_store %arg3[%c0_3, %c0_4], %3 {strides = array<i32>} : memref<128x128xbf16, #tpu.memory_space<vmem>>, vector<128x128xbf16>,
    return
  }
  func.func @transform_0(%arg0: i32) -> (i32, i32) {
    %c0_i32 = arith.constant 0 : i32
    %c0_i32_0 = arith.constant 0 : i32
    return %arg0, %c0_i32 : i32, i32
  }
  func.func @transform_1(%arg0: i32) -> (i32, i32) {
    %c0_i32 = arith.constant 0 : i32
    %c0_i32_0 = arith.constant 0 : i32
    %c0_i32_1 = arith.constant 0 : i32
    return %c0_i32, %c0_i32_0 : i32, i32
  }
  func.func @transform_2(%arg0: i32) -> (i32, i32) {
    %c0_i32 = arith.constant 0 : i32
    %c0_i32_0 = arith.constant 0 : i32
    return %arg0, %c0_i32 : i32, i32
  }
}

module attributes {stable_mosaic.version = 11 : i64} {
  func.func @_agg_relu_proj_kernel(%arg0: i32, %arg1: i32, %arg2: memref<128x256xbf16, #tpu.memory_space<vmem>>, %arg3: memref<256x128xbf16, #tpu.memory_space<vmem>>, %arg4: memref<128x128xbf16, #tpu.memory_space<vmem>>, %arg5: memref<128x128xbf16, #tpu.memory_space<vmem>>, %arg6: memref<128x128xf32, #tpu.memory_space<vmem>>) attributes {dimension_semantics = [#tpu.dimension_semantics<parallel>, #tpu.dimension_semantics<arbitrary>], iteration_bounds = array<i64: 2, 1>, scalar_prefetch = 0 : i64, scratch_operands = 1 : i64, tpu.core_type = #tpu.core_type<tc>, window_params = [{transform_indices = @transform_0, window_bounds = array<i64: 128, 256>}, {pipeline_mode = #tpu.pipeline_mode<synchronous>, transform_indices = @transform_1, window_bounds = array<i64: 256, 128>}, {pipeline_mode = #tpu.pipeline_mode<synchronous>, transform_indices = @transform_2, window_bounds = array<i64: 128, 128>}, {transform_indices = @transform_3, window_bounds = array<i64: 128, 128>}]} {
    %c0_i32 = arith.constant 0 : i32
    %0 = arith.cmpi eq, %arg1, %c0_i32 : i32
    %1 = arith.extui %0 : i1 to i32
    %c0_i32_0 = arith.constant 0 : i32
    %2 = arith.cmpi ne, %1, %c0_i32_0 : i32
    scf.if %2 {
      %cst_10 = arith.constant 0.000000e+00 : f32
      %12 = vector.broadcast %cst_10 : f32 to vector<128x128xf32>
      %c0_11 = arith.constant 0 : index
      %c0_12 = arith.constant 0 : index
      %13 = vector.load %arg6[%c0_11, %c0_12] : memref<128x128xf32, #tpu.memory_space<vmem>>, vector<128x128xf32>
      tpu.vector_store %arg6[%c0_11, %c0_12], %12 {strides = array<i32>} : memref<128x128xf32, #tpu.memory_space<vmem>>, vector<128x128xf32>,
    } else {
    }
    %c0 = arith.constant 0 : index
    %c0_1 = arith.constant 0 : index
    %3 = vector.load %arg3[%c0, %c0_1] : memref<256x128xbf16, #tpu.memory_space<vmem>>, vector<256x128xbf16>
    %c0_2 = arith.constant 0 : index
    %c0_3 = arith.constant 0 : index
    %4 = vector.load %arg6[%c0_2, %c0_3] : memref<128x128xf32, #tpu.memory_space<vmem>>, vector<128x128xf32>
    %c0_4 = arith.constant 0 : index
    %c0_5 = arith.constant 0 : index
    %5 = vector.load %arg2[%c0_4, %c0_5] : memref<128x256xbf16, #tpu.memory_space<vmem>>, vector<128x256xbf16>
    %cst = arith.constant dense<0.000000e+00> : vector<128x128xf32>
    %6 = tpu.matmul %5, %3, %cst {dimension_numbers = #tpu.dot_dimension_numbers<[1], [0], [0], [1], [0, 0, 1, 1], [], []>} : vector<128x256xbf16>, vector<256x128xbf16>, vector<128x128xf32> -> vector<128x128xf32>
    %7 = arith.addf %4, %6 : vector<128x128xf32>
    %c0_6 = arith.constant 0 : index
    %c0_7 = arith.constant 0 : index
    %8 = vector.load %arg6[%c0_6, %c0_7] : memref<128x128xf32, #tpu.memory_space<vmem>>, vector<128x128xf32>
    tpu.vector_store %arg6[%c0_6, %c0_7], %7 {strides = array<i32>} : memref<128x128xf32, #tpu.memory_space<vmem>>, vector<128x128xf32>,
    %c0_i32_8 = arith.constant 0 : i32
    %9 = arith.cmpi eq, %arg1, %c0_i32_8 : i32
    %10 = arith.extui %9 : i1 to i32
    %c0_i32_9 = arith.constant 0 : i32
    %11 = arith.cmpi ne, %10, %c0_i32_9 : i32
    scf.if %11 {
      %c0_10 = arith.constant 0 : index
      %c0_11 = arith.constant 0 : index
      %12 = vector.load %arg6[%c0_10, %c0_11] : memref<128x128xf32, #tpu.memory_space<vmem>>, vector<128x128xf32>
      %cst_12 = arith.constant 0.000000e+00 : f32
      %13 = vector.broadcast %cst_12 : f32 to vector<128x128xf32>
      %14 = arith.maximumf %12, %13 : vector<128x128xf32>
      %15 = arith.truncf %14 : vector<128x128xf32> to vector<128x128xbf16>
      %c0_13 = arith.constant 0 : index
      %c0_14 = arith.constant 0 : index
      %16 = vector.load %arg4[%c0_13, %c0_14] : memref<128x128xbf16, #tpu.memory_space<vmem>>, vector<128x128xbf16>
      %cst_15 = arith.constant dense<0.000000e+00> : vector<128x128xf32>
      %17 = tpu.matmul %15, %16, %cst_15 {dimension_numbers = #tpu.dot_dimension_numbers<[1], [0], [0], [1], [0, 0, 1, 1], [], []>} : vector<128x128xbf16>, vector<128x128xbf16>, vector<128x128xf32> -> vector<128x128xf32>
      %18 = arith.truncf %17 : vector<128x128xf32> to vector<128x128xbf16>
      %c0_16 = arith.constant 0 : index
      %c0_17 = arith.constant 0 : index
      %19 = vector.load %arg5[%c0_16, %c0_17] : memref<128x128xbf16, #tpu.memory_space<vmem>>, vector<128x128xbf16>
      tpu.vector_store %arg5[%c0_16, %c0_17], %18 {strides = array<i32>} : memref<128x128xbf16, #tpu.memory_space<vmem>>, vector<128x128xbf16>,
    } else {
    }
    return
  }
  func.func @transform_0(%arg0: i32, %arg1: i32) -> (i32, i32) {
    %c0_i32 = arith.constant 0 : i32
    return %arg0, %arg1 : i32, i32
  }
  func.func @transform_1(%arg0: i32, %arg1: i32) -> (i32, i32) {
    %c0_i32 = arith.constant 0 : i32
    %c0_i32_0 = arith.constant 0 : i32
    %c0_i32_1 = arith.constant 0 : i32
    return %c0_i32, %c0_i32_0 : i32, i32
  }
  func.func @transform_2(%arg0: i32, %arg1: i32) -> (i32, i32) {
    %c0_i32 = arith.constant 0 : i32
    %c0_i32_0 = arith.constant 0 : i32
    %c0_i32_1 = arith.constant 0 : i32
    return %c0_i32, %c0_i32_0 : i32, i32
  }
  func.func @transform_3(%arg0: i32, %arg1: i32) -> (i32, i32) {
    %c0_i32 = arith.constant 0 : i32
    %c0_i32_0 = arith.constant 0 : i32
    return %arg0, %c0_i32 : i32, i32
  }
}

module attributes {stable_mosaic.version = 11 : i64} {
  func.func @_agg_logsoftmax_kernel(%arg0: i32, %arg1: i32, %arg2: memref<128x256xbf16, #tpu.memory_space<vmem>>, %arg3: memref<256x128xbf16, #tpu.memory_space<vmem>>, %arg4: memref<128x128xf32, #tpu.memory_space<vmem>>, %arg5: memref<128x128xf32, #tpu.memory_space<vmem>>) attributes {dimension_semantics = [#tpu.dimension_semantics<parallel>, #tpu.dimension_semantics<arbitrary>], iteration_bounds = array<i64: 2, 1>, scalar_prefetch = 0 : i64, scratch_operands = 1 : i64, tpu.core_type = #tpu.core_type<tc>, window_params = [{transform_indices = @transform_0, window_bounds = array<i64: 128, 256>}, {pipeline_mode = #tpu.pipeline_mode<synchronous>, transform_indices = @transform_1, window_bounds = array<i64: 256, 128>}, {transform_indices = @transform_2, window_bounds = array<i64: 128, 128>}]} {
    %c0_i32 = arith.constant 0 : i32
    %0 = arith.cmpi eq, %arg1, %c0_i32 : i32
    %1 = arith.extui %0 : i1 to i32
    %c0_i32_0 = arith.constant 0 : i32
    %2 = arith.cmpi ne, %1, %c0_i32_0 : i32
    scf.if %2 {
      %cst_10 = arith.constant 0.000000e+00 : f32
      %12 = vector.broadcast %cst_10 : f32 to vector<128x128xf32>
      %c0_11 = arith.constant 0 : index
      %c0_12 = arith.constant 0 : index
      %13 = vector.load %arg5[%c0_11, %c0_12] : memref<128x128xf32, #tpu.memory_space<vmem>>, vector<128x128xf32>
      tpu.vector_store %arg5[%c0_11, %c0_12], %12 {strides = array<i32>} : memref<128x128xf32, #tpu.memory_space<vmem>>, vector<128x128xf32>,
    } else {
    }
    %c0 = arith.constant 0 : index
    %c0_1 = arith.constant 0 : index
    %3 = vector.load %arg3[%c0, %c0_1] : memref<256x128xbf16, #tpu.memory_space<vmem>>, vector<256x128xbf16>
    %c0_2 = arith.constant 0 : index
    %c0_3 = arith.constant 0 : index
    %4 = vector.load %arg5[%c0_2, %c0_3] : memref<128x128xf32, #tpu.memory_space<vmem>>, vector<128x128xf32>
    %c0_4 = arith.constant 0 : index
    %c0_5 = arith.constant 0 : index
    %5 = vector.load %arg2[%c0_4, %c0_5] : memref<128x256xbf16, #tpu.memory_space<vmem>>, vector<128x256xbf16>
    %cst = arith.constant dense<0.000000e+00> : vector<128x128xf32>
    %6 = tpu.matmul %5, %3, %cst {dimension_numbers = #tpu.dot_dimension_numbers<[1], [0], [0], [1], [0, 0, 1, 1], [], []>} : vector<128x256xbf16>, vector<256x128xbf16>, vector<128x128xf32> -> vector<128x128xf32>
    %7 = arith.addf %4, %6 : vector<128x128xf32>
    %c0_6 = arith.constant 0 : index
    %c0_7 = arith.constant 0 : index
    %8 = vector.load %arg5[%c0_6, %c0_7] : memref<128x128xf32, #tpu.memory_space<vmem>>, vector<128x128xf32>
    tpu.vector_store %arg5[%c0_6, %c0_7], %7 {strides = array<i32>} : memref<128x128xf32, #tpu.memory_space<vmem>>, vector<128x128xf32>,
    %c0_i32_8 = arith.constant 0 : i32
    %9 = arith.cmpi eq, %arg1, %c0_i32_8 : i32
    %10 = arith.extui %9 : i1 to i32
    %c0_i32_9 = arith.constant 0 : i32
    %11 = arith.cmpi ne, %10, %c0_i32_9 : i32
    scf.if %11 {
      %c0_10 = arith.constant 0 : index
      %c0_11 = arith.constant 0 : index
      %12 = vector.load %arg5[%c0_10, %c0_11] : memref<128x128xf32, #tpu.memory_space<vmem>>, vector<128x128xf32>
      %13 = tpu.iota {dimensions = array<i32: 1>} : vector<128x128xi32>
      %c8_i32 = arith.constant 8 : i32
      %14 = vector.broadcast %c8_i32 : i32 to vector<128x128xi32>
      %15 = arith.cmpi slt, %13, %14 : vector<128x128xi32>
      %cst_12 = arith.constant -1.000000e+30 : f32
      %16 = vector.broadcast %cst_12 : f32 to vector<128x128xf32>
      %17 = arith.select %15, %12, %16 : vector<128x128xi1>, vector<128x128xf32>
      %cst_13 = arith.constant dense<0xFF800000> : vector<128xf32>
      %18 = vector.multi_reduction <maximumf>, %17, %cst_13 [1] : vector<128x128xf32> to vector<128xf32>
      %19 = vector.shape_cast %18 : vector<128xf32> to vector<128x1xf32>
      %20 = vector.broadcast %19 : vector<128x1xf32> to vector<128x128xf32>
      %21 = arith.subf %17, %20 : vector<128x128xf32>
      %22 = math.exp %21 : vector<128x128xf32>
      %cst_14 = arith.constant dense<0.000000e+00> : vector<128xf32>
      %23 = vector.multi_reduction <add>, %22, %cst_14 [1] : vector<128x128xf32> to vector<128xf32>
      %24 = vector.shape_cast %23 : vector<128xf32> to vector<128x1xf32>
      %25 = math.log %24 : vector<128x1xf32>
      %26 = vector.broadcast %25 : vector<128x1xf32> to vector<128x128xf32>
      %27 = arith.subf %21, %26 : vector<128x128xf32>
      %c0_15 = arith.constant 0 : index
      %c0_16 = arith.constant 0 : index
      %28 = vector.load %arg4[%c0_15, %c0_16] : memref<128x128xf32, #tpu.memory_space<vmem>>, vector<128x128xf32>
      tpu.vector_store %arg4[%c0_15, %c0_16], %27 {strides = array<i32>} : memref<128x128xf32, #tpu.memory_space<vmem>>, vector<128x128xf32>,
    } else {
    }
    return
  }
  func.func @transform_0(%arg0: i32, %arg1: i32) -> (i32, i32) {
    %c0_i32 = arith.constant 0 : i32
    return %arg0, %arg1 : i32, i32
  }
  func.func @transform_1(%arg0: i32, %arg1: i32) -> (i32, i32) {
    %c0_i32 = arith.constant 0 : i32
    %c0_i32_0 = arith.constant 0 : i32
    %c0_i32_1 = arith.constant 0 : i32
    return %c0_i32, %c0_i32_0 : i32, i32
  }
  func.func @transform_2(%arg0: i32, %arg1: i32) -> (i32, i32) {
    %c0_i32 = arith.constant 0 : i32
    %c0_i32_0 = arith.constant 0 : i32
    return %arg0, %c0_i32 : i32, i32
  }
}

</mosaic_0001>

<llo_original>
// kernel: mlpgnn_forward.3
$region0: #{mlpgnn_forward.3}
  #allocation0 [shape = 'u32[]', space=smem, size = 0x4, offset = 0x4, fixed_abs, tag = 'smem constant byte address 0x4 - core index']
  #allocation1 [shape = 'u32[72,128]{1,0:T(1,128)}', space=vmem, size = 0x9000, scoped, tag = 'internal scratch']
  %s0 = inlined_call_operand.vmem [shape: bf16[256,128], index: 0, kind: input, shape index: {}]
  %s1 = inlined_call_operand.vmem [shape: bf16[128,128], index: 1, kind: input, shape index: {}]
  %s2 = inlined_call_operand.vmem [shape: bf16[256,128], index: 2, kind: output, shape index: {}]
  %s3 = sld [smem:[#allocation0]]
  $region41: #{mlpgnn_forward.3} parent=0
    _
  %s5 = ssub.s32 1, %s3
  %s6 = scalar_select 0, %s5, %s3
  loop: start=0, step=1, limit=4
  $region2: #{mlpgnn_forward.3} parent=0 // loop_pre_header
    _
  $region3: #{mlpgnn_forward.3} parent=0 // loop_header
    %s8 = sphi 0, %s12
    %p9 = scmp.ge.s32.totalorder %s8, 4
    %s18 = sphi 0, %s20
    %s21 = sphi 0, %s18
    %s22 = sphi 0, %s21
    %s38 = sphi 0, %s22
    %s42 = sphi 0, %s42
    %s44 = sphi 0, %s42
    %s45 = sphi 0, %s44
    %s59 = sphi 0, %s45
    %s65 = sphi 0, %s67
    %s68 = sphi 0, %s65
    %s69 = sphi 0, %s68
    %s85 = sphi 0, %s69
  $region4: #{mlpgnn_forward.3} parent=0 // loop_header_branch
    %11 = sbr.rel (%p9) target = $region8
  $region5: #{mlpgnn_forward.3} parent=0 // loop_body
    %s13 = ssub.s32 %s8, 1
    %s14 = ssub.s32 %s8, 2
    %s15 = sadd.s32 %s8, 1
    %s16 = ssub.s32 %s8, %s15
    %p17 = scmp.eq.s32.totalorder %s16, 0
    %s19 = sadd.s32 %s18, 1
    %s20 = scalar_select %p17, %s18, %s19
    %p23 = pneg %p17
    %p24 = scmp.eq.s32.totalorder %s8, 1
    %p25 = por %p23, %p24
    %p26 = scmp.ne.s32.totalorder %s18, %s21
    %p27 = scmp.eq.s32.totalorder %s8, 0
    %p28 = por %p26, %p27
    %p29 = scmp.ne.s32.totalorder %s18, %s21
    %p30 = scmp.eq.s32.totalorder %s13, 1
    %p31 = por %p29, %p30
    %p32 = scmp.ne.s32.totalorder %s21, %s22
    %p33 = scmp.eq.s32.totalorder %s13, 0
    %p34 = por %p32, %p33
    %p35 = scmp.ne.s32.totalorder %s21, %s22
    %p36 = scmp.eq.s32.totalorder %s14, 1
    %p37 = por %p35, %p36
    %p39 = scmp.ne.s32.totalorder %s22, %s38
    %p40 = scmp.eq.s32.totalorder %s14, 0
    %p41 = por %p39, %p40
    %s43 = sadd.s32 %s42, 1
    %p46 = scmp.eq.s32.totalorder %s8, 1
    %p47 = scmp.ne.s32.totalorder %s42, %s44
    %p48 = scmp.eq.s32.totalorder %s8, 0
    %p49 = por %p47, %p48
    %p50 = scmp.ne.s32.totalorder %s42, %s44
    %p51 = scmp.eq.s32.totalorder %s13, 1
    %p52 = por %p50, %p51
    %p53 = scmp.ne.s32.totalorder %s44, %s45
    %p54 = scmp.eq.s32.totalorder %s13, 0
    %p55 = por %p53, %p54
    %p56 = scmp.ne.s32.totalorder %s44, %s45
    %p57 = scmp.eq.s32.totalorder %s14, 1
    %p58 = por %p56, %p57
    %p60 = scmp.ne.s32.totalorder %s45, %s59
    %p61 = scmp.eq.s32.totalorder %s14, 0
    %p62 = por %p60, %p61
    %s63 = ssub.s32 %s8, %s15
    %p64 = scmp.eq.s32.totalorder %s63, 0
    %s66 = sadd.s32 %s65, 1
    %s67 = scalar_select %p64, %s65, %s66
    %p70 = pneg %p64
    %p71 = scmp.eq.s32.totalorder %s8, 1
    %p72 = por %p70, %p71
    %p73 = scmp.ne.s32.totalorder %s65, %s68
    %p74 = scmp.eq.s32.totalorder %s8, 0
    %p75 = por %p73, %p74
    %p76 = scmp.ne.s32.totalorder %s65, %s68
    %p77 = scmp.eq.s32.totalorder %s13, 1
    %p78 = por %p76, %p77
    %p79 = scmp.ne.s32.totalorder %s68, %s69
    %p80 = scmp.eq.s32.totalorder %s13, 0
    %p81 = por %p79, %p80
    %p82 = scmp.ne.s32.totalorder %s68, %s69
    %p83 = scmp.eq.s32.totalorder %s14, 1
    %p84 = por %p82, %p83
    %p86 = scmp.ne.s32.totalorder %s69, %s85
    %p87 = scmp.eq.s32.totalorder %s14, 0
    %p88 = por %p86, %p87
    %p89 = scmp.le.s32.totalorder 1, %s8
    %p90 = scmp.lt.s32.totalorder %s8, 3
    %p91 = pnand %p89, %p90
    %p92 = pneg %p91
    // Predicated region
    $region9: #{mlpgnn_forward.3} parent=5 // pred_check
      _
    $region10: #{mlpgnn_forward.3} parent=5 // pred_check_branch
      %94 = sbr.rel (%p91) target = $region12
    $region11: #{mlpgnn_forward.3} parent=5 // pred_region
      %s95 = ssub.s32 %s8, 1
      // Predicated region
      $region13: #{mlpgnn_forward.3} parent=11 // pred_check
        %p96 = pneg %p55
      $region14: #{mlpgnn_forward.3} parent=11 // pred_check_branch
        %98 = sbr.rel (%p96) target = $region16
      $region15: #{mlpgnn_forward.3} parent=11 // pred_region
        _
      $region16: #{mlpgnn_forward.3} parent=11 // pred_fallthru
        _
    $region12: #{mlpgnn_forward.3} parent=5 // pred_fallthru
      _
    %p99 = scmp.lt.s32.totalorder %s8, 2
    // Predicated region
    $region17: #{mlpgnn_forward.3} parent=5 // pred_check
      %p100 = pneg %p99
    $region18: #{mlpgnn_forward.3} parent=5 // pred_check_branch
      %102 = sbr.rel (%p100) target = $region20
    $region19: #{mlpgnn_forward.3} parent=5 // pred_region
      // Predicated region
      $region21: #{mlpgnn_forward.3} parent=19 // pred_check
        %p103 = pneg %p28
      $region22: #{mlpgnn_forward.3} parent=19 // pred_check_branch
        %105 = sbr.rel (%p103) target = $region24
      $region23: #{mlpgnn_forward.3} parent=19 // pred_region
        %s106 = smul.u32 16, %s8
        %p107 = scmp.lt.s32.totalorder %s106, 31
        %s108 = scalar_select %p107, %s106, 31
        %s109 = smul.addr %s108, 4
        %s110 = scalar_lea.vmem %s0, %s109
        %s111 = smul.u32 16, %s8
      $region24: #{mlpgnn_forward.3} parent=19 // pred_fallthru
        _
    $region20: #{mlpgnn_forward.3} parent=5 // pred_fallthru
      _
    %p112 = scmp.le.s32.totalorder 1, %s8
    %p113 = scmp.lt.s32.totalorder %s8, 3
    %p114 = pnand %p112, %p113
    %p115 = pneg %p114
    // Predicated region
    $region25: #{mlpgnn_forward.3} parent=5 // pred_check
      _
    $region26: #{mlpgnn_forward.3} parent=5 // pred_check_branch
      %117 = sbr.rel (%p114) target = $region28
    $region27: #{mlpgnn_forward.3} parent=5 // pred_region
      %s118 = ssub.s32 %s8, 1
      %s119 = smul.u32 16, %s13
      %p120 = scmp.lt.s32.totalorder %s119, 31
      %s121 = scalar_select %p120, %s119, 31
      %s122 = smul.addr %s121, 4
      %s123 = scalar_lea.vmem %s0, %s122
      %p124 = pneg %p34
      %p125 = pneg %p31
      %p126 = pneg %p55
      %p127 = pneg %p52
      %p128 = pneg %p81
      %p129 = pneg %p78
      %s130 = smul.u32 16, %s13
      %p131 = scmp.lt.s32.totalorder %s130, 31
      %s132 = scalar_select %p131, %s130, 31
      %s133 = smul.addr %s132, 4
      %s134 = scalar_lea.vmem %s2, %s133
      %s135 = smul.u32 16, %s13
      %p136 = scmp.lt.s32.totalorder %s135, 31
      %s137 = scalar_select %p136, %s135, 31
      %s138 = smul.addr %s137, 4
      %s139 = scalar_lea.vmem %s0, %s138
      %s140 = smul.u32 16, %s13
      %s141 = smul.u32 16, %s13
      %p142 = scmp.lt.s32.totalorder %s141, 31
      %s143 = scalar_select %p142, %s141, 31
      %s144 = smul.addr %s143, 4
      %s145 = scalar_lea.vmem %s2, %s144
      %s146 = smul.u32 16, %s13
      %v147 = vld [vmem:[%s139] sm:$0xf]
      %v148 = vld [vmem:[%s139 + $0x4] sm:$0xf]
      %v149 = vld [vmem:[%s139 + $0x8] sm:$0xf]
      %v150 = vld [vmem:[%s139 + $0xc] sm:$0xf]
      %v151 = vld [vmem:[%s139 + $0x10] sm:$0xf]
      %v152 = vld [vmem:[%s139 + $0x14] sm:$0xf]
      %v153 = vld [vmem:[%s139 + $0x18] sm:$0xf]
      %v154 = vld [vmem:[%s139 + $0x1c] sm:$0xf]
      %v155 = vld [vmem:[%s139 + $0x20] sm:$0xf]
      %v156 = vld [vmem:[%s139 + $0x24] sm:$0xf]
      %v157 = vld [vmem:[%s139 + $0x28] sm:$0xf]
      %v158 = vld [vmem:[%s139 + $0x2c] sm:$0xf]
      %v159 = vld [vmem:[%s139 + $0x30] sm:$0xf]
      %v160 = vld [vmem:[%s139 + $0x34] sm:$0xf]
      %v161 = vld [vmem:[%s139 + $0x38] sm:$0xf]
      %v162 = vld [vmem:[%s139 + $0x3c] sm:$0xf]
      %v163 = vld [vmem:[%s1] sm:$0xf]
      %v164 = vld [vmem:[%s1 + $0x4] sm:$0xf]
      %v165 = vld [vmem:[%s1 + $0x8] sm:$0xf]
      %v166 = vld [vmem:[%s1 + $0xc] sm:$0xf]
      %v167 = vld [vmem:[%s1 + $0x10] sm:$0xf]
      %v168 = vld [vmem:[%s1 + $0x14] sm:$0xf]
      %v169 = vld [vmem:[%s1 + $0x18] sm:$0xf]
      %v170 = vld [vmem:[%s1 + $0x1c] sm:$0xf]
      %v171 = vld [vmem:[%s1 + $0x20] sm:$0xf]
      %v172 = vld [vmem:[%s1 + $0x24] sm:$0xf]
      %v173 = vld [vmem:[%s1 + $0x28] sm:$0xf]
      %v174 = vld [vmem:[%s1 + $0x2c] sm:$0xf]
      %v175 = vld [vmem:[%s1 + $0x30] sm:$0xf]
      %v176 = vld [vmem:[%s1 + $0x34] sm:$0xf]
      %v177 = vld [vmem:[%s1 + $0x38] sm:$0xf]
      %v178 = vld [vmem:[%s1 + $0x3c] sm:$0xf]
      %v195 = vunpack.c.l.b16 %v147
      %v196 = vunpack.c.l.b16 %v148
      %v197 = vunpack.c.l.b16 %v149
      %v198 = vunpack.c.l.b16 %v150
      %v199 = vunpack.c.l.b16 %v151
      %v200 = vunpack.c.l.b16 %v152
      %v201 = vunpack.c.l.b16 %v153
      %v202 = vunpack.c.l.b16 %v154
      %v203 = vunpack.c.l.b16 %v155
      %v204 = vunpack.c.l.b16 %v156
      %v205 = vunpack.c.l.b16 %v157
      %v206 = vunpack.c.l.b16 %v158
      %v207 = vunpack.c.l.b16 %v159
      %v208 = vunpack.c.l.b16 %v160
      %v209 = vunpack.c.l.b16 %v161
      %v210 = vunpack.c.l.b16 %v162
      %v211 = vpack.c.b16 %v196, %v195
      %v212 = vpack.c.b16 %v198, %v197
      %v213 = vpack.c.b16 %v200, %v199
      %v214 = vpack.c.b16 %v202, %v201
      %v215 = vpack.c.b16 %v204, %v203
      %v216 = vpack.c.b16 %v206, %v205
      %v217 = vpack.c.b16 %v208, %v207
      %v218 = vpack.c.b16 %v210, %v209
      %v243 = vunpack.c.l.b16 %v163
      %v244 = vunpack.c.l.b16 %v164
      %v245 = vunpack.c.l.b16 %v165
      %v246 = vunpack.c.l.b16 %v166
      %v247 = vunpack.c.l.b16 %v167
      %v248 = vunpack.c.l.b16 %v168
      %v249 = vunpack.c.l.b16 %v169
      %v250 = vunpack.c.l.b16 %v170
      %v251 = vunpack.c.l.b16 %v171
      %v252 = vunpack.c.l.b16 %v172
      %v253 = vunpack.c.l.b16 %v173
      %v254 = vunpack.c.l.b16 %v174
      %v255 = vunpack.c.l.b16 %v175
      %v256 = vunpack.c.l.b16 %v176
      %v257 = vunpack.c.l.b16 %v177
      %v258 = vunpack.c.l.b16 %v178
      %v259 = vpack.c.b16 %v244, %v243
      %v260 = vpack.c.b16 %v246, %v245
      %v261 = vpack.c.b16 %v248, %v247
      %v262 = vpack.c.b16 %v250, %v249
      %v263 = vpack.c.b16 %v252, %v251
      %v264 = vpack.c.b16 %v254, %v253
      %v265 = vpack.c.b16 %v256, %v255
      %v266 = vpack.c.b16 %v258, %v257
      %275 = vmatpush.bf16.msra.mxu0 %v266
      %276 = vmatpush.bf16.msra.mxu0 %v265
      %277 = vmatpush.bf16.msra.mxu0 %v264
      %278 = vmatpush.bf16.msra.mxu0 %v263
      %279 = vmatpush.bf16.msra.mxu0 %v262
      %280 = vmatpush.bf16.msra.mxu0 %v261
      %281 = vmatpush.bf16.msra.mxu0 %v260
      %282 = vmatpush.bf16.msra.mxu0 %v259
      %283 = vmatmul.bf16.gmra.mxu0 %v211
      %v284 = vpop.f32.mrf.mxu0
      %v285 = vadd.f32 0.0, %v284
      %v286 = vpop.f32.mrf.mxu0
      %v287 = vadd.f32 0.0, %v286
      %288 = vmatmul.bf16.gmra.mxu0 %v212
      %v289 = vpop.f32.mrf.mxu0
      %v290 = vadd.f32 0.0, %v289
      %v291 = vpop.f32.mrf.mxu0
      %v292 = vadd.f32 0.0, %v291
      %293 = vmatmul.bf16.gmra.mxu0 %v213
      %v294 = vpop.f32.mrf.mxu0
      %v295 = vadd.f32 0.0, %v294
      %v296 = vpop.f32.mrf.mxu0
      %v297 = vadd.f32 0.0, %v296
      %298 = vmatmul.bf16.gmra.mxu0 %v214
      %v299 = vpop.f32.mrf.mxu0
      %v300 = vadd.f32 0.0, %v299
      %v301 = vpop.f32.mrf.mxu0
      %v302 = vadd.f32 0.0, %v301
      %303 = vmatmul.bf16.gmra.mxu0 %v215
      %v304 = vpop.f32.mrf.mxu0
      %v305 = vadd.f32 0.0, %v304
      %v306 = vpop.f32.mrf.mxu0
      %v307 = vadd.f32 0.0, %v306
      %308 = vmatmul.bf16.gmra.mxu0 %v216
      %v309 = vpop.f32.mrf.mxu0
      %v310 = vadd.f32 0.0, %v309
      %v311 = vpop.f32.mrf.mxu0
      %v312 = vadd.f32 0.0, %v311
      %313 = vmatmul.bf16.gmra.mxu0 %v217
      %v314 = vpop.f32.mrf.mxu0
      %v315 = vadd.f32 0.0, %v314
      %v316 = vpop.f32.mrf.mxu0
      %v317 = vadd.f32 0.0, %v316
      %318 = vmatmul.bf16.gmra.mxu0 %v218
      %v319 = vpop.f32.mrf.mxu0
      %v320 = vadd.f32 0.0, %v319
      %v321 = vpop.f32.mrf.mxu0
      %v322 = vadd.f32 0.0, %v321
      %323 = vdwg.mxu0
      %v324 = vpack.c.bf16 %v285, %v285
      %v325 = vpack.c.bf16 %v287, %v287
      %v326 = vpack.c.bf16 %v290, %v290
      %v327 = vpack.c.bf16 %v292, %v292
      %v328 = vpack.c.bf16 %v295, %v295
      %v329 = vpack.c.bf16 %v297, %v297
      %v330 = vpack.c.bf16 %v300, %v300
      %v331 = vpack.c.bf16 %v302, %v302
      %v332 = vpack.c.bf16 %v305, %v305
      %v333 = vpack.c.bf16 %v307, %v307
      %v334 = vpack.c.bf16 %v310, %v310
      %v335 = vpack.c.bf16 %v312, %v312
      %v336 = vpack.c.bf16 %v315, %v315
      %v337 = vpack.c.bf16 %v317, %v317
      %v338 = vpack.c.bf16 %v320, %v320
      %v339 = vpack.c.bf16 %v322, %v322
      %340 = vst [vmem:[%s145] sm:$0xf] %v324
      %341 = vst [vmem:[%s145 + $0x4] sm:$0xf] %v325
      %342 = vst [vmem:[%s145 + $0x8] sm:$0xf] %v326
      %343 = vst [vmem:[%s145 + $0xc] sm:$0xf] %v327
      %344 = vst [vmem:[%s145 + $0x10] sm:$0xf] %v328
      %345 = vst [vmem:[%s145 + $0x14] sm:$0xf] %v329
      %346 = vst [vmem:[%s145 + $0x18] sm:$0xf] %v330
      %347 = vst [vmem:[%s145 + $0x1c] sm:$0xf] %v331
      %348 = vst [vmem:[%s145 + $0x20] sm:$0xf] %v332
      %349 = vst [vmem:[%s145 + $0x24] sm:$0xf] %v333
      %350 = vst [vmem:[%s145 + $0x28] sm:$0xf] %v334
      %351 = vst [vmem:[%s145 + $0x2c] sm:$0xf] %v335
      %352 = vst [vmem:[%s145 + $0x30] sm:$0xf] %v336
      %353 = vst [vmem:[%s145 + $0x34] sm:$0xf] %v337
      %354 = vst [vmem:[%s145 + $0x38] sm:$0xf] %v338
      %355 = vst [vmem:[%s145 + $0x3c] sm:$0xf] %v339
      %s356 = smul.u32 16, %s13
      %p357 = scmp.lt.s32.totalorder %s356, 31
      %s358 = scalar_select %p357, %s356, 31
      %s359 = smul.addr %s358, 4
      %s360 = scalar_lea.vmem %s2, %s359
      // Predicated region
      $region29: #{mlpgnn_forward.3} parent=27 // pred_check
        %p361 = pneg %p78
      $region30: #{mlpgnn_forward.3} parent=27 // pred_check_branch
        %363 = sbr.rel (%p361) target = $region32
      $region31: #{mlpgnn_forward.3} parent=27 // pred_region
        %s364 = smul.u32 16, %s13
      $region32: #{mlpgnn_forward.3} parent=27 // pred_fallthru
        _
    $region28: #{mlpgnn_forward.3} parent=5 // pred_fallthru
      _
    %p365 = scmp.le.s32.totalorder 2, %s8
    // Predicated region
    $region33: #{mlpgnn_forward.3} parent=5 // pred_check
      %p366 = pneg %p365
    $region34: #{mlpgnn_forward.3} parent=5 // pred_check_branch
      %368 = sbr.rel (%p366) target = $region36
    $region35: #{mlpgnn_forward.3} parent=5 // pred_region
      %s369 = ssub.s32 %s8, 2
      // Predicated region
      $region37: #{mlpgnn_forward.3} parent=35 // pred_check
        %p370 = pneg %p84
      $region38: #{mlpgnn_forward.3} parent=35 // pred_check_branch
        %372 = sbr.rel (%p370) target = $region40
      $region39: #{mlpgnn_forward.3} parent=35 // pred_region
        %s373 = smul.u32 16, %s14
        %p374 = scmp.lt.s32.totalorder %s373, 31
        %s375 = scalar_select %p374, %s373, 31
        %s376 = smul.addr %s375, 4
        %s377 = scalar_lea.vmem %s2, %s376
      $region40: #{mlpgnn_forward.3} parent=35 // pred_fallthru
        _
    $region36: #{mlpgnn_forward.3} parent=5 // pred_fallthru
      _
  $region6: #{mlpgnn_forward.3} parent=0 // loop_footer
    %s12 = sadd.s32 1, %s8
  $region7: #{mlpgnn_forward.3} parent=0 // loop_footer_branch
    %7 = sbr.rel target = $region3
  $region8: #{mlpgnn_forward.3} parent=0 // loop_exit
    _

// kernel: mlpgnn_forward.5
$region0: #{mlpgnn_forward.5}
  #allocation0 [shape = 'u32[]', space=smem, size = 0x4, offset = 0x4, fixed_abs, tag = 'smem constant byte address 0x4 - core index']
  #allocation1 [shape = 'u32[72,128]{1,0:T(1,128)}', space=vmem, size = 0x9000, scoped, tag = 'internal scratch']
  #allocation2 [shape = 'f32[128,128]{1,0:T(8,128)}', space=vmem, size = 0x10000, scoped, tag = 'scratch operand']
  %s0 = inlined_call_operand.vmem [shape: bf16[256,256], index: 0, kind: input, shape index: {}]
  %s1 = inlined_call_operand.vmem [shape: bf16[256,128], index: 1, kind: input, shape index: {}]
  %s2 = inlined_call_operand.vmem [shape: f32[256,128], index: 2, kind: output, shape index: {}]
  %s3 = sld [smem:[#allocation0]]
  $region49: #{mlpgnn_forward.5} parent=0
    _
  %s5 = ssub.s32 1, %s3
  %s6 = scalar_select 0, %s5, %s3
  loop: start=0, step=1, limit=4
  $region2: #{mlpgnn_forward.5} parent=0 // loop_pre_header
    _
  $region3: #{mlpgnn_forward.5} parent=0 // loop_header
    %s8 = sphi 0, %s12
    %p9 = scmp.ge.s32.totalorder %s8, 4
    %s15 = sphi 0, %s27
    %s16 = sphi 0, %s23
    %s17 = sphi 0, %s15
    %s18 = sphi 0, %s16
    %s19 = sphi 0, %s17
    %s20 = sphi 0, %s18
    %s32 = sphi 0, %s34
    %s35 = sphi 0, %s32
    %s36 = sphi 0, %s35
    %s52 = sphi 0, %s36
    %s56 = sphi 0, %s56
    %s58 = sphi 0, %s56
    %s59 = sphi 0, %s58
    %s73 = sphi 0, %s59
    %s79 = sphi 0, %s81
    %s82 = sphi 0, %s79
    %s83 = sphi 0, %s82
    %s99 = sphi 0, %s83
  $region4: #{mlpgnn_forward.5} parent=0 // loop_header_branch
    %11 = sbr.rel (%p9) target = $region8
  $region5: #{mlpgnn_forward.5} parent=0 // loop_body
    %s13 = ssub.s32 %s8, 1
    %s14 = ssub.s32 %s8, 2
    %s21 = sadd.s32 1, %s16
    %p22 = scmp.ge.s32.totalorder %s21, 1
    %s23 = scalar_select %p22, 0, %s21
    %s24 = sadd.s32 1, %s15
    %s25 = scalar_select %p22, %s24, %s15
    %p26 = scmp.ge.s32.totalorder %s25, 2
    %s27 = scalar_select %p26, 0, %s25
    %s28 = ssub.s32 %s15, %s27
    %s29 = ssub.s32 %s16, %s23
    %s30 = sor.u32 %s28, %s29
    %p31 = scmp.eq.s32.totalorder %s30, 0
    %s33 = sadd.s32 %s32, 1
    %s34 = scalar_select %p31, %s32, %s33
    %p37 = pneg %p31
    %p38 = scmp.eq.s32.totalorder %s8, 1
    %p39 = por %p37, %p38
    %p40 = scmp.ne.s32.totalorder %s32, %s35
    %p41 = scmp.eq.s32.totalorder %s8, 0
    %p42 = por %p40, %p41
    %p43 = scmp.ne.s32.totalorder %s32, %s35
    %p44 = scmp.eq.s32.totalorder %s13, 1
    %p45 = por %p43, %p44
    %p46 = scmp.ne.s32.totalorder %s35, %s36
    %p47 = scmp.eq.s32.totalorder %s13, 0
    %p48 = por %p46, %p47
    %p49 = scmp.ne.s32.totalorder %s35, %s36
    %p50 = scmp.eq.s32.totalorder %s14, 1
    %p51 = por %p49, %p50
    %p53 = scmp.ne.s32.totalorder %s36, %s52
    %p54 = scmp.eq.s32.totalorder %s14, 0
    %p55 = por %p53, %p54
    %s57 = sadd.s32 %s56, 1
    %p60 = scmp.eq.s32.totalorder %s8, 1
    %p61 = scmp.ne.s32.totalorder %s56, %s58
    %p62 = scmp.eq.s32.totalorder %s8, 0
    %p63 = por %p61, %p62
    %p64 = scmp.ne.s32.totalorder %s56, %s58
    %p65 = scmp.eq.s32.totalorder %s13, 1
    %p66 = por %p64, %p65
    %p67 = scmp.ne.s32.totalorder %s58, %s59
    %p68 = scmp.eq.s32.totalorder %s13, 0
    %p69 = por %p67, %p68
    %p70 = scmp.ne.s32.totalorder %s58, %s59
    %p71 = scmp.eq.s32.totalorder %s14, 1
    %p72 = por %p70, %p71
    %p74 = scmp.ne.s32.totalorder %s59, %s73
    %p75 = scmp.eq.s32.totalorder %s14, 0
    %p76 = por %p74, %p75
    %s77 = ssub.s32 %s15, %s27
    %p78 = scmp.eq.s32.totalorder %s77, 0
    %s80 = sadd.s32 %s79, 1
    %s81 = scalar_select %p78, %s79, %s80
    %p84 = pneg %p78
    %p85 = scmp.eq.s32.totalorder %s8, 1
    %p86 = por %p84, %p85
    %p87 = scmp.ne.s32.totalorder %s79, %s82
    %p88 = scmp.eq.s32.totalorder %s8, 0
    %p89 = por %p87, %p88
    %p90 = scmp.ne.s32.totalorder %s79, %s82
    %p91 = scmp.eq.s32.totalorder %s13, 1
    %p92 = por %p90, %p91
    %p93 = scmp.ne.s32.totalorder %s82, %s83
    %p94 = scmp.eq.s32.totalorder %s13, 0
    %p95 = por %p93, %p94
    %p96 = scmp.ne.s32.totalorder %s82, %s83
    %p97 = scmp.eq.s32.totalorder %s14, 1
    %p98 = por %p96, %p97
    %p100 = scmp.ne.s32.totalorder %s83, %s99
    %p101 = scmp.eq.s32.totalorder %s14, 0
    %p102 = por %p100, %p101
    %p103 = scmp.le.s32.totalorder 1, %s8
    %p104 = scmp.lt.s32.totalorder %s8, 3
    %p105 = pnand %p103, %p104
    %p106 = pneg %p105
    // Predicated region
    $region9: #{mlpgnn_forward.5} parent=5 // pred_check
      _
    $region10: #{mlpgnn_forward.5} parent=5 // pred_check_branch
      %108 = sbr.rel (%p105) target = $region12
    $region11: #{mlpgnn_forward.5} parent=5 // pred_region
      %s109 = ssub.s32 %s8, 1
      // Predicated region
      $region13: #{mlpgnn_forward.5} parent=11 // pred_check
        %p110 = pneg %p69
      $region14: #{mlpgnn_forward.5} parent=11 // pred_check_branch
        %112 = sbr.rel (%p110) target = $region16
      $region15: #{mlpgnn_forward.5} parent=11 // pred_region
        _
      $region16: #{mlpgnn_forward.5} parent=11 // pred_fallthru
        _
    $region12: #{mlpgnn_forward.5} parent=5 // pred_fallthru
      _
    %p113 = scmp.lt.s32.totalorder %s8, 2
    // Predicated region
    $region17: #{mlpgnn_forward.5} parent=5 // pred_check
      %p114 = pneg %p113
    $region18: #{mlpgnn_forward.5} parent=5 // pred_check_branch
      %116 = sbr.rel (%p114) target = $region20
    $region19: #{mlpgnn_forward.5} parent=5 // pred_region
      // Predicated region
      $region21: #{mlpgnn_forward.5} parent=19 // pred_check
        %p117 = pneg %p42
      $region22: #{mlpgnn_forward.5} parent=19 // pred_check_branch
        %119 = sbr.rel (%p117) target = $region24
      $region23: #{mlpgnn_forward.5} parent=19 // pred_region
        %s120 = smul.u32 16, %s15
        %s121 = smul.u32 2, %s16
        %p122 = scmp.lt.s32.totalorder %s120, 31
        %s123 = scalar_select %p122, %s120, 31
        %p124 = scmp.lt.s32.totalorder %s121, 1
        %s125 = scalar_select %p124, %s121, 1
        %s126 = smul.addr %s123, 2
        %s127 = sadd.s32 %s125, %s126
        %s128 = smul.addr %s127, 4
        %s129 = scalar_lea.vmem %s0, %s128
        %s130 = smul.u32 16, %s15
        %s131 = smul.u32 2, %s16
      $region24: #{mlpgnn_forward.5} parent=19 // pred_fallthru
        _
    $region20: #{mlpgnn_forward.5} parent=5 // pred_fallthru
      _
    %p132 = scmp.le.s32.totalorder 1, %s8
    %p133 = scmp.lt.s32.totalorder %s8, 3
    %p134 = pnand %p132, %p133
    %p135 = pneg %p134
    // Predicated region
    $region25: #{mlpgnn_forward.5} parent=5 // pred_check
      _
    $region26: #{mlpgnn_forward.5} parent=5 // pred_check_branch
      %137 = sbr.rel (%p134) target = $region28
    $region27: #{mlpgnn_forward.5} parent=5 // pred_region
      %s138 = ssub.s32 %s8, 1
      %s139 = smul.u32 16, %s17
      %s140 = smul.u32 2, %s18
      %p141 = scmp.lt.s32.totalorder %s139, 31
      %s142 = scalar_select %p141, %s139, 31
      %p143 = scmp.lt.s32.totalorder %s140, 1
      %s144 = scalar_select %p143, %s140, 1
      %s145 = smul.addr %s142, 2
      %s146 = sadd.s32 %s144, %s145
      %s147 = smul.addr %s146, 4
      %s148 = scalar_lea.vmem %s0, %s147
      %p149 = pneg %p48
      %p150 = pneg %p45
      %p151 = pneg %p69
      %p152 = pneg %p66
      %p153 = pneg %p95
      %p154 = pneg %p92
      %s155 = smul.u32 16, %s17
      %p156 = scmp.lt.s32.totalorder %s155, 31
      %s157 = scalar_select %p156, %s155, 31
      %s158 = smul.addr %s157, 8
      %s159 = scalar_lea.vmem %s2, %s158
      %s160 = smul.u32 16, %s17
      %s161 = smul.u32 2, %s18
      %p162 = scmp.lt.s32.totalorder %s160, 31
      %s163 = scalar_select %p162, %s160, 31
      %p164 = scmp.lt.s32.totalorder %s161, 1
      %s165 = scalar_select %p164, %s161, 1
      %s166 = smul.addr %s163, 2
      %s167 = sadd.s32 %s165, %s166
      %s168 = smul.addr %s167, 4
      %s169 = scalar_lea.vmem %s0, %s168
      %s170 = smul.u32 16, %s17
      %s171 = smul.u32 2, %s18
      %s172 = smul.u32 16, %s17
      %p173 = scmp.lt.s32.totalorder %s172, 31
      %s174 = scalar_select %p173, %s172, 31
      %s175 = smul.addr %s174, 8
      %s176 = scalar_lea.vmem %s2, %s175
      %s177 = smul.u32 16, %s17
      %p178 = scmp.eq.s32.totalorder %s18, 0
      // Predicated region
      $region29: #{mlpgnn_forward.5} parent=27 // pred_check
        %p179 = pneg %p178
      $region30: #{mlpgnn_forward.5} parent=27 // pred_check_branch
        %181 = sbr.rel (%p179) target = $region32
      $region31: #{mlpgnn_forward.5} parent=27 // pred_region
        %182 = vst [vmem:[#allocation2] sm:$0xff] 0.0
        %183 = vst [vmem:[#allocation2 + $0x8] sm:$0xff] 0.0
        %184 = vst [vmem:[#allocation2 + $0x10] sm:$0xff] 0.0
        %185 = vst [vmem:[#allocation2 + $0x18] sm:$0xff] 0.0
        %186 = vst [vmem:[#allocation2 + $0x20] sm:$0xff] 0.0
        %187 = vst [vmem:[#allocation2 + $0x28] sm:$0xff] 0.0
        %188 = vst [vmem:[#allocation2 + $0x30] sm:$0xff] 0.0
        %189 = vst [vmem:[#allocation2 + $0x38] sm:$0xff] 0.0
        %190 = vst [vmem:[#allocation2 + $0x40] sm:$0xff] 0.0
        %191 = vst [vmem:[#allocation2 + $0x48] sm:$0xff] 0.0
        %192 = vst [vmem:[#allocation2 + $0x50] sm:$0xff] 0.0
        %193 = vst [vmem:[#allocation2 + $0x58] sm:$0xff] 0.0
        %194 = vst [vmem:[#allocation2 + $0x60] sm:$0xff] 0.0
        %195 = vst [vmem:[#allocation2 + $0x68] sm:$0xff] 0.0
        %196 = vst [vmem:[#allocation2 + $0x70] sm:$0xff] 0.0
        %197 = vst [vmem:[#allocation2 + $0x78] sm:$0xff] 0.0
      $region32: #{mlpgnn_forward.5} parent=27 // pred_fallthru
        _
      %v198 = vld [vmem:[%s1] sm:$0xf]
      %v199 = vld [vmem:[%s1 + $0x4] sm:$0xf]
      %v200 = vld [vmem:[%s1 + $0x8] sm:$0xf]
      %v201 = vld [vmem:[%s1 + $0xc] sm:$0xf]
      %v202 = vld [vmem:[%s1 + $0x10] sm:$0xf]
      %v203 = vld [vmem:[%s1 + $0x14] sm:$0xf]
      %v204 = vld [vmem:[%s1 + $0x18] sm:$0xf]
      %v205 = vld [vmem:[%s1 + $0x1c] sm:$0xf]
      %v206 = vld [vmem:[%s1 + $0x20] sm:$0xf]
      %v207 = vld [vmem:[%s1 + $0x24] sm:$0xf]
      %v208 = vld [vmem:[%s1 + $0x28] sm:$0xf]
      %v209 = vld [vmem:[%s1 + $0x2c] sm:$0xf]
      %v210 = vld [vmem:[%s1 + $0x30] sm:$0xf]
      %v211 = vld [vmem:[%s1 + $0x34] sm:$0xf]
      %v212 = vld [vmem:[%s1 + $0x38] sm:$0xf]
      %v213 = vld [vmem:[%s1 + $0x3c] sm:$0xf]
      %v214 = vld [vmem:[%s1 + $0x40] sm:$0xf]
      %v215 = vld [vmem:[%s1 + $0x44] sm:$0xf]
      %v216 = vld [vmem:[%s1 + $0x48] sm:$0xf]
      %v217 = vld [vmem:[%s1 + $0x4c] sm:$0xf]
      %v218 = vld [vmem:[%s1 + $0x50] sm:$0xf]
      %v219 = vld [vmem:[%s1 + $0x54] sm:$0xf]
      %v220 = vld [vmem:[%s1 + $0x58] sm:$0xf]
      %v221 = vld [vmem:[%s1 + $0x5c] sm:$0xf]
      %v222 = vld [vmem:[%s1 + $0x60] sm:$0xf]
      %v223 = vld [vmem:[%s1 + $0x64] sm:$0xf]
      %v224 = vld [vmem:[%s1 + $0x68] sm:$0xf]
      %v225 = vld [vmem:[%s1 + $0x6c] sm:$0xf]
      %v226 = vld [vmem:[%s1 + $0x70] sm:$0xf]
      %v227 = vld [vmem:[%s1 + $0x74] sm:$0xf]
      %v228 = vld [vmem:[%s1 + $0x78] sm:$0xf]
      %v229 = vld [vmem:[%s1 + $0x7c] sm:$0xf]
      %v230 = vld [vmem:[#allocation2] sm:$0xff]
      %v231 = vld [vmem:[#allocation2 + $0x8] sm:$0xff]
      %v232 = vld [vmem:[#allocation2 + $0x10] sm:$0xff]
      %v233 = vld [vmem:[#allocation2 + $0x18] sm:$0xff]
      %v234 = vld [vmem:[#allocation2 + $0x20] sm:$0xff]
      %v235 = vld [vmem:[#allocation2 + $0x28] sm:$0xff]
      %v236 = vld [vmem:[#allocation2 + $0x30] sm:$0xff]
      %v237 = vld [vmem:[#allocation2 + $0x38] sm:$0xff]
      %v238 = vld [vmem:[#allocation2 + $0x40] sm:$0xff]
      %v239 = vld [vmem:[#allocation2 + $0x48] sm:$0xff]
      %v240 = vld [vmem:[#allocation2 + $0x50] sm:$0xff]
      %v241 = vld [vmem:[#allocation2 + $0x58] sm:$0xff]
      %v242 = vld [vmem:[#allocation2 + $0x60] sm:$0xff]
      %v243 = vld [vmem:[#allocation2 + $0x68] sm:$0xff]
      %v244 = vld [vmem:[#allocation2 + $0x70] sm:$0xff]
      %v245 = vld [vmem:[#allocation2 + $0x78] sm:$0xff]
      %v246 = vld [vmem:[%s169] sm:$0xff]
      %v247 = vld [vmem:[%s169 + $0x8] sm:$0xff]
      %v248 = vld [vmem:[%s169 + $0x10] sm:$0xff]
      %v249 = vld [vmem:[%s169 + $0x18] sm:$0xff]
      %v250 = vld [vmem:[%s169 + $0x20] sm:$0xff]
      %v251 = vld [vmem:[%s169 + $0x28] sm:$0xff]
      %v252 = vld [vmem:[%s169 + $0x30] sm:$0xff]
      %v253 = vld [vmem:[%s169 + $0x38] sm:$0xff]
      %v254 = vld [vmem:[%s169 + $0x40] sm:$0xff]
      %v255 = vld [vmem:[%s169 + $0x48] sm:$0xff]
      %v256 = vld [vmem:[%s169 + $0x50] sm:$0xff]
      %v257 = vld [vmem:[%s169 + $0x58] sm:$0xff]
      %v258 = vld [vmem:[%s169 + $0x60] sm:$0xff]
      %v259 = vld [vmem:[%s169 + $0x68] sm:$0xff]
      %v260 = vld [vmem:[%s169 + $0x70] sm:$0xff]
      %v261 = vld [vmem:[%s169 + $0x78] sm:$0xff]
      %v278 = vunpack.c.l.b16 %v246
      %v279 = vunpack.c.h.b16 %v246
      %v280 = vunpack.c.l.b16 %v247
      %v281 = vunpack.c.h.b16 %v247
      %v282 = vunpack.c.l.b16 %v248
      %v283 = vunpack.c.h.b16 %v248
      %v284 = vunpack.c.l.b16 %v249
      %v285 = vunpack.c.h.b16 %v249
      %v286 = vunpack.c.l.b16 %v250
      %v287 = vunpack.c.h.b16 %v250
      %v288 = vunpack.c.l.b16 %v251
      %v289 = vunpack.c.h.b16 %v251
      %v290 = vunpack.c.l.b16 %v252
      %v291 = vunpack.c.h.b16 %v252
      %v292 = vunpack.c.l.b16 %v253
      %v293 = vunpack.c.h.b16 %v253
      %v294 = vunpack.c.l.b16 %v254
      %v295 = vunpack.c.h.b16 %v254
      %v296 = vunpack.c.l.b16 %v255
      %v297 = vunpack.c.h.b16 %v255
      %v298 = vunpack.c.l.b16 %v256
      %v299 = vunpack.c.h.b16 %v256
      %v300 = vunpack.c.l.b16 %v257
      %v301 = vunpack.c.h.b16 %v257
      %v302 = vunpack.c.l.b16 %v258
      %v303 = vunpack.c.h.b16 %v258
      %v304 = vunpack.c.l.b16 %v259
      %v305 = vunpack.c.h.b16 %v259
      %v306 = vunpack.c.l.b16 %v260
      %v307 = vunpack.c.h.b16 %v260
      %v308 = vunpack.c.l.b16 %v261
      %v309 = vunpack.c.h.b16 %v261
      %v310 = vpack.c.b16 %v280, %v278
      %v311 = vpack.c.b16 %v281, %v279
      %v312 = vpack.c.b16 %v284, %v282
      %v313 = vpack.c.b16 %v285, %v283
      %v314 = vpack.c.b16 %v288, %v286
      %v315 = vpack.c.b16 %v289, %v287
      %v316 = vpack.c.b16 %v292, %v290
      %v317 = vpack.c.b16 %v293, %v291
      %v318 = vpack.c.b16 %v296, %v294
      %v319 = vpack.c.b16 %v297, %v295
      %v320 = vpack.c.b16 %v300, %v298
      %v321 = vpack.c.b16 %v301, %v299
      %v322 = vpack.c.b16 %v304, %v302
      %v323 = vpack.c.b16 %v305, %v303
      %v324 = vpack.c.b16 %v308, %v306
      %v325 = vpack.c.b16 %v309, %v307
      %v374 = vunpack.c.l.b16 %v198
      %v375 = vunpack.c.l.b16 %v199
      %v376 = vunpack.c.l.b16 %v200
      %v377 = vunpack.c.l.b16 %v201
      %v378 = vunpack.c.l.b16 %v202
      %v379 = vunpack.c.l.b16 %v203
      %v380 = vunpack.c.l.b16 %v204
      %v381 = vunpack.c.l.b16 %v205
      %v382 = vunpack.c.l.b16 %v206
      %v383 = vunpack.c.l.b16 %v207
      %v384 = vunpack.c.l.b16 %v208
      %v385 = vunpack.c.l.b16 %v209
      %v386 = vunpack.c.l.b16 %v210
      %v387 = vunpack.c.l.b16 %v211
      %v388 = vunpack.c.l.b16 %v212
      %v389 = vunpack.c.l.b16 %v213
      %v390 = vunpack.c.l.b16 %v214
      %v391 = vunpack.c.l.b16 %v215
      %v392 = vunpack.c.l.b16 %v216
      %v393 = vunpack.c.l.b16 %v217
      %v394 = vunpack.c.l.b16 %v218
      %v395 = vunpack.c.l.b16 %v219
      %v396 = vunpack.c.l.b16 %v220
      %v397 = vunpack.c.l.b16 %v221
      %v398 = vunpack.c.l.b16 %v222
      %v399 = vunpack.c.l.b16 %v223
      %v400 = vunpack.c.l.b16 %v224
      %v401 = vunpack.c.l.b16 %v225
      %v402 = vunpack.c.l.b16 %v226
      %v403 = vunpack.c.l.b16 %v227
      %v404 = vunpack.c.l.b16 %v228
      %v405 = vunpack.c.l.b16 %v229
      %v406 = vpack.c.b16 %v375, %v374
      %v407 = vpack.c.b16 %v377, %v376
      %v408 = vpack.c.b16 %v379, %v378
      %v409 = vpack.c.b16 %v381, %v380
      %v410 = vpack.c.b16 %v383, %v382
      %v411 = vpack.c.b16 %v385, %v384
      %v412 = vpack.c.b16 %v387, %v386
      %v413 = vpack.c.b16 %v389, %v388
      %v414 = vpack.c.b16 %v391, %v390
      %v415 = vpack.c.b16 %v393, %v392
      %v416 = vpack.c.b16 %v395, %v394
      %v417 = vpack.c.b16 %v397, %v396
      %v418 = vpack.c.b16 %v399, %v398
      %v419 = vpack.c.b16 %v401, %v400
      %v420 = vpack.c.b16 %v403, %v402
      %v421 = vpack.c.b16 %v405, %v404
      %438 = vmatpush.bf16.msra.mxu0 %v413
      %439 = vmatpush.bf16.msra.mxu0 %v412
      %440 = vmatpush.bf16.msra.mxu0 %v411
      %441 = vmatpush.bf16.msra.mxu0 %v410
      %442 = vmatpush.bf16.msra.mxu0 %v409
      %443 = vmatpush.bf16.msra.mxu0 %v408
      %444 = vmatpush.bf16.msra.mxu0 %v407
      %445 = vmatpush.bf16.msra.mxu0 %v406
      %446 = vmatmul.bf16.gmra.mxu0 %v310
      %v447 = vpop.f32.mrf.mxu0
      %v448 = vadd.f32 0.0, %v447
      %v449 = vpop.f32.mrf.mxu0
      %v450 = vadd.f32 0.0, %v449
      %451 = vmatmul.bf16.gmra.mxu0 %v312
      %v452 = vpop.f32.mrf.mxu0
      %v453 = vadd.f32 0.0, %v452
      %v454 = vpop.f32.mrf.mxu0
      %v455 = vadd.f32 0.0, %v454
      %456 = vmatmul.bf16.gmra.mxu0 %v314
      %v457 = vpop.f32.mrf.mxu0
      %v458 = vadd.f32 0.0, %v457
      %v459 = vpop.f32.mrf.mxu0
      %v460 = vadd.f32 0.0, %v459
      %461 = vmatmul.bf16.gmra.mxu0 %v316
      %v462 = vpop.f32.mrf.mxu0
      %v463 = vadd.f32 0.0, %v462
      %v464 = vpop.f32.mrf.mxu0
      %v465 = vadd.f32 0.0, %v464
      %466 = vmatmul.bf16.gmra.mxu0 %v318
      %v467 = vpop.f32.mrf.mxu0
      %v468 = vadd.f32 0.0, %v467
      %v469 = vpop.f32.mrf.mxu0
      %v470 = vadd.f32 0.0, %v469
      %471 = vmatmul.bf16.gmra.mxu0 %v320
      %v472 = vpop.f32.mrf.mxu0
      %v473 = vadd.f32 0.0, %v472
      %v474 = vpop.f32.mrf.mxu0
      %v475 = vadd.f32 0.0, %v474
      %476 = vmatmul.bf16.gmra.mxu0 %v322
      %v477 = vpop.f32.mrf.mxu0
      %v478 = vadd.f32 0.0, %v477
      %v479 = vpop.f32.mrf.mxu0
      %v480 = vadd.f32 0.0, %v479
      %481 = vmatmul.bf16.gmra.mxu0 %v324
      %v482 = vpop.f32.mrf.mxu0
      %v483 = vadd.f32 0.0, %v482
      %v484 = vpop.f32.mrf.mxu0
      %v485 = vadd.f32 0.0, %v484
      %486 = vdwg.mxu0
      %487 = vmatpush.bf16.msra.mxu0 %v421
      %488 = vmatpush.bf16.msra.mxu0 %v420
      %489 = vmatpush.bf16.msra.mxu0 %v419
      %490 = vmatpush.bf16.msra.mxu0 %v418
      %491 = vmatpush.bf16.msra.mxu0 %v417
      %492 = vmatpush.bf16.msra.mxu0 %v416
      %493 = vmatpush.bf16.msra.mxu0 %v415
      %494 = vmatpush.bf16.msra.mxu0 %v414
      %495 = vmatmul.bf16.gmra.mxu0 %v311
      %v496 = vpop.f32.mrf.mxu0
      %v497 = vadd.f32 %v448, %v496
      %v498 = vpop.f32.mrf.mxu0
      %v499 = vadd.f32 %v450, %v498
      %500 = vmatmul.bf16.gmra.mxu0 %v313
      %v501 = vpop.f32.mrf.mxu0
      %v502 = vadd.f32 %v453, %v501
      %v503 = vpop.f32.mrf.mxu0
      %v504 = vadd.f32 %v455, %v503
      %505 = vmatmul.bf16.gmra.mxu0 %v315
      %v506 = vpop.f32.mrf.mxu0
      %v507 = vadd.f32 %v458, %v506
      %v508 = vpop.f32.mrf.mxu0
      %v509 = vadd.f32 %v460, %v508
      %510 = vmatmul.bf16.gmra.mxu0 %v317
      %v511 = vpop.f32.mrf.mxu0
      %v512 = vadd.f32 %v463, %v511
      %v513 = vpop.f32.mrf.mxu0
      %v514 = vadd.f32 %v465, %v513
      %515 = vmatmul.bf16.gmra.mxu0 %v319
      %v516 = vpop.f32.mrf.mxu0
      %v517 = vadd.f32 %v468, %v516
      %v518 = vpop.f32.mrf.mxu0
      %v519 = vadd.f32 %v470, %v518
      %520 = vmatmul.bf16.gmra.mxu0 %v321
      %v521 = vpop.f32.mrf.mxu0
      %v522 = vadd.f32 %v473, %v521
      %v523 = vpop.f32.mrf.mxu0
      %v524 = vadd.f32 %v475, %v523
      %525 = vmatmul.bf16.gmra.mxu0 %v323
      %v526 = vpop.f32.mrf.mxu0
      %v527 = vadd.f32 %v478, %v526
      %v528 = vpop.f32.mrf.mxu0
      %v529 = vadd.f32 %v480, %v528
      %530 = vmatmul.bf16.gmra.mxu0 %v325
      %v531 = vpop.f32.mrf.mxu0
      %v532 = vadd.f32 %v483, %v531
      %v533 = vpop.f32.mrf.mxu0
      %v534 = vadd.f32 %v485, %v533
      %535 = vdwg.mxu0
      %v536 = vadd.f32 %v230, %v497
      %v537 = vadd.f32 %v231, %v499
      %v538 = vadd.f32 %v232, %v502
      %v539 = vadd.f32 %v233, %v504
      %v540 = vadd.f32 %v234, %v507
      %v541 = vadd.f32 %v235, %v509
      %v542 = vadd.f32 %v236, %v512
      %v543 = vadd.f32 %v237, %v514
      %v544 = vadd.f32 %v238, %v517
      %v545 = vadd.f32 %v239, %v519
      %v546 = vadd.f32 %v240, %v522
      %v547 = vadd.f32 %v241, %v524
      %v548 = vadd.f32 %v242, %v527
      %v549 = vadd.f32 %v243, %v529
      %v550 = vadd.f32 %v244, %v532
      %v551 = vadd.f32 %v245, %v534
      %552 = vst [vmem:[#allocation2] sm:$0xff] %v536
      %553 = vst [vmem:[#allocation2 + $0x8] sm:$0xff] %v537
      %554 = vst [vmem:[#allocation2 + $0x10] sm:$0xff] %v538
      %555 = vst [vmem:[#allocation2 + $0x18] sm:$0xff] %v539
      %556 = vst [vmem:[#allocation2 + $0x20] sm:$0xff] %v540
      %557 = vst [vmem:[#allocation2 + $0x28] sm:$0xff] %v541
      %558 = vst [vmem:[#allocation2 + $0x30] sm:$0xff] %v542
      %559 = vst [vmem:[#allocation2 + $0x38] sm:$0xff] %v543
      %560 = vst [vmem:[#allocation2 + $0x40] sm:$0xff] %v544
      %561 = vst [vmem:[#allocation2 + $0x48] sm:$0xff] %v545
      %562 = vst [vmem:[#allocation2 + $0x50] sm:$0xff] %v546
      %563 = vst [vmem:[#allocation2 + $0x58] sm:$0xff] %v547
      %564 = vst [vmem:[#allocation2 + $0x60] sm:$0xff] %v548
      %565 = vst [vmem:[#allocation2 + $0x68] sm:$0xff] %v549
      %566 = vst [vmem:[#allocation2 + $0x70] sm:$0xff] %v550
      %567 = vst [vmem:[#allocation2 + $0x78] sm:$0xff] %v551
      // Predicated region
      $region33: #{mlpgnn_forward.5} parent=27 // pred_check
        %p568 = pneg %p178
      $region34: #{mlpgnn_forward.5} parent=27 // pred_check_branch
        %570 = sbr.rel (%p568) target = $region36
      $region35: #{mlpgnn_forward.5} parent=27 // pred_region
        %v571 = vld [vmem:[#allocation2] sm:$0xff]
        %v572 = vld [vmem:[#allocation2 + $0x8] sm:$0xff]
        %v573 = vld [vmem:[#allocation2 + $0x10] sm:$0xff]
        %v574 = vld [vmem:[#allocation2 + $0x18] sm:$0xff]
        %v575 = vld [vmem:[#allocation2 + $0x20] sm:$0xff]
        %v576 = vld [vmem:[#allocation2 + $0x28] sm:$0xff]
        %v577 = vld [vmem:[#allocation2 + $0x30] sm:$0xff]
        %v578 = vld [vmem:[#allocation2 + $0x38] sm:$0xff]
        %v579 = vld [vmem:[#allocation2 + $0x40] sm:$0xff]
        %v580 = vld [vmem:[#allocation2 + $0x48] sm:$0xff]
        %v581 = vld [vmem:[#allocation2 + $0x50] sm:$0xff]
        %v582 = vld [vmem:[#allocation2 + $0x58] sm:$0xff]
        %v583 = vld [vmem:[#allocation2 + $0x60] sm:$0xff]
        %v584 = vld [vmem:[#allocation2 + $0x68] sm:$0xff]
        %v585 = vld [vmem:[#allocation2 + $0x70] sm:$0xff]
        %v586 = vld [vmem:[#allocation2 + $0x78] sm:$0xff]
        %v587 = vlaneseq
        %v588 = vand.u32 %v587, 127
        %vm589 = vcmp.lt.s32.totalorder %v588, 8
        %v590 = vsel %vm589, %v571, -1e+30
        %v591 = vsel %vm589, %v572, -1e+30
        %v592 = vsel %vm589, %v573, -1e+30
        %v593 = vsel %vm589, %v574, -1e+30
        %v594 = vsel %vm589, %v575, -1e+30
        %v595 = vsel %vm589, %v576, -1e+30
        %v596 = vsel %vm589, %v577, -1e+30
        %v597 = vsel %vm589, %v578, -1e+30
        %v598 = vsel %vm589, %v579, -1e+30
        %v599 = vsel %vm589, %v580, -1e+30
        %v600 = vsel %vm589, %v581, -1e+30
        %v601 = vsel %vm589, %v582, -1e+30
        %v602 = vsel %vm589, %v583, -1e+30
        %v603 = vsel %vm589, %v584, -1e+30
        %v604 = vsel %vm589, %v585, -1e+30
        %v605 = vsel %vm589, %v586, -1e+30
        %606 = vmax.xlane.f32.xlu0 %v590
        %v607 = vpop.xlane.xlu0 %606
        %608 = vmax.xlane.f32.xlu0 %v591
        %v609 = vpop.xlane.xlu0 %608
        %610 = vmax.xlane.f32.xlu0 %v592
        %v611 = vpop.xlane.xlu0 %610
        %612 = vmax.xlane.f32.xlu0 %v593
        %v613 = vpop.xlane.xlu0 %612
        %614 = vmax.xlane.f32.xlu0 %v594
        %v615 = vpop.xlane.xlu0 %614
        %616 = vmax.xlane.f32.xlu0 %v595
        %v617 = vpop.xlane.xlu0 %616
        %618 = vmax.xlane.f32.xlu0 %v596
        %v619 = vpop.xlane.xlu0 %618
        %620 = vmax.xlane.f32.xlu0 %v597
        %v621 = vpop.xlane.xlu0 %620
        %622 = vmax.xlane.f32.xlu0 %v598
        %v623 = vpop.xlane.xlu0 %622
        %624 = vmax.xlane.f32.xlu0 %v599
        %v625 = vpop.xlane.xlu0 %624
        %626 = vmax.xlane.f32.xlu0 %v600
        %v627 = vpop.xlane.xlu0 %626
        %628 = vmax.xlane.f32.xlu0 %v601
        %v629 = vpop.xlane.xlu0 %628
        %630 = vmax.xlane.f32.xlu0 %v602
        %v631 = vpop.xlane.xlu0 %630
        %632 = vmax.xlane.f32.xlu0 %v603
        %v633 = vpop.xlane.xlu0 %632
        %634 = vmax.xlane.f32.xlu0 %v604
        %v635 = vpop.xlane.xlu0 %634
        %636 = vmax.xlane.f32.xlu0 %v605
        %v637 = vpop.xlane.xlu0 %636
        %v638 = vsub.f32 %v590, %v607
        %v639 = vsub.f32 %v591, %v609
        %v640 = vsub.f32 %v592, %v611
        %v641 = vsub.f32 %v593, %v613
        %v642 = vsub.f32 %v594, %v615
        %v643 = vsub.f32 %v595, %v617
        %v644 = vsub.f32 %v596, %v619
        %v645 = vsub.f32 %v597, %v621
        %v646 = vsub.f32 %v598, %v623
        %v647 = vsub.f32 %v599, %v625
        %v648 = vsub.f32 %v600, %v627
        %v649 = vsub.f32 %v601, %v629
        %v650 = vsub.f32 %v602, %v631
        %v651 = vsub.f32 %v603, %v633
        %v652 = vsub.f32 %v604, %v635
        %v653 = vsub.f32 %v605, %v637
        %v654 = vmul.f32 %v638, 1.442695
        %v655 = vpow.pop %v654
        %v656 = vmul.f32 %v639, 1.442695
        %v657 = vpow.pop %v656
        %v658 = vmul.f32 %v640, 1.442695
        %v659 = vpow.pop %v658
        %v660 = vmul.f32 %v641, 1.442695
        %v661 = vpow.pop %v660
        %v662 = vmul.f32 %v642, 1.442695
        %v663 = vpow.pop %v662
        %v664 = vmul.f32 %v643, 1.442695
        %v665 = vpow.pop %v664
        %v666 = vmul.f32 %v644, 1.442695
        %v667 = vpow.pop %v666
        %v668 = vmul.f32 %v645, 1.442695
        %v669 = vpow.pop %v668
        %v670 = vmul.f32 %v646, 1.442695
        %v671 = vpow.pop %v670
        %v672 = vmul.f32 %v647, 1.442695
        %v673 = vpow.pop %v672
        %v674 = vmul.f32 %v648, 1.442695
        %v675 = vpow.pop %v674
        %v676 = vmul.f32 %v649, 1.442695
        %v677 = vpow.pop %v676
        %v678 = vmul.f32 %v650, 1.442695
        %v679 = vpow.pop %v678
        %v680 = vmul.f32 %v651, 1.442695
        %v681 = vpow.pop %v680
        %v682 = vmul.f32 %v652, 1.442695
        %v683 = vpow.pop %v682
        %v684 = vmul.f32 %v653, 1.442695
        %v685 = vpow.pop %v684
        %686 = vadd.xlane.f32.xlu0 %v655
        %v687 = vpop.xlane.xlu0 %686
        %688 = vadd.xlane.f32.xlu0 %v657
        %v689 = vpop.xlane.xlu0 %688
        %690 = vadd.xlane.f32.xlu0 %v659
        %v691 = vpop.xlane.xlu0 %690
        %692 = vadd.xlane.f32.xlu0 %v661
        %v693 = vpop.xlane.xlu0 %692
        %694 = vadd.xlane.f32.xlu0 %v663
        %v695 = vpop.xlane.xlu0 %694
        %696 = vadd.xlane.f32.xlu0 %v665
        %v697 = vpop.xlane.xlu0 %696
        %698 = vadd.xlane.f32.xlu0 %v667
        %v699 = vpop.xlane.xlu0 %698
        %700 = vadd.xlane.f32.xlu0 %v669
        %v701 = vpop.xlane.xlu0 %700
        %702 = vadd.xlane.f32.xlu0 %v671
        %v703 = vpop.xlane.xlu0 %702
        %704 = vadd.xlane.f32.xlu0 %v673
        %v705 = vpop.xlane.xlu0 %704
        %706 = vadd.xlane.f32.xlu0 %v675
        %v707 = vpop.xlane.xlu0 %706
        %708 = vadd.xlane.f32.xlu0 %v677
        %v709 = vpop.xlane.xlu0 %708
        %710 = vadd.xlane.f32.xlu0 %v679
        %v711 = vpop.xlane.xlu0 %710
        %712 = vadd.xlane.f32.xlu0 %v681
        %v713 = vpop.xlane.xlu0 %712
        %714 = vadd.xlane.f32.xlu0 %v683
        %v715 = vpop.xlane.xlu0 %714
        %716 = vadd.xlane.f32.xlu0 %v685
        %v717 = vpop.xlane.xlu0 %716
        %v718 = vlog2.pop %v687
        %v719 = vmul.f32 %v718, 0.6931472
        %v720 = vlog2.pop %v689
        %v721 = vmul.f32 %v720, 0.6931472
        %v722 = vlog2.pop %v691
        %v723 = vmul.f32 %v722, 0.6931472
        %v724 = vlog2.pop %v693
        %v725 = vmul.f32 %v724, 0.6931472
        %v726 = vlog2.pop %v695
        %v727 = vmul.f32 %v726, 0.6931472
        %v728 = vlog2.pop %v697
        %v729 = vmul.f32 %v728, 0.6931472
        %v730 = vlog2.pop %v699
        %v731 = vmul.f32 %v730, 0.6931472
        %v732 = vlog2.pop %v701
        %v733 = vmul.f32 %v732, 0.6931472
        %v734 = vlog2.pop %v703
        %v735 = vmul.f32 %v734, 0.6931472
        %v736 = vlog2.pop %v705
        %v737 = vmul.f32 %v736, 0.6931472
        %v738 = vlog2.pop %v707
        %v739 = vmul.f32 %v738, 0.6931472
        %v740 = vlog2.pop %v709
        %v741 = vmul.f32 %v740, 0.6931472
        %v742 = vlog2.pop %v711
        %v743 = vmul.f32 %v742, 0.6931472
        %v744 = vlog2.pop %v713
        %v745 = vmul.f32 %v744, 0.6931472
        %v746 = vlog2.pop %v715
        %v747 = vmul.f32 %v746, 0.6931472
        %v748 = vlog2.pop %v717
        %v749 = vmul.f32 %v748, 0.6931472
        %v750 = vsub.f32 %v638, %v719
        %v751 = vsub.f32 %v639, %v721
        %v752 = vsub.f32 %v640, %v723
        %v753 = vsub.f32 %v641, %v725
        %v754 = vsub.f32 %v642, %v727
        %v755 = vsub.f32 %v643, %v729
        %v756 = vsub.f32 %v644, %v731
        %v757 = vsub.f32 %v645, %v733
        %v758 = vsub.f32 %v646, %v735
        %v759 = vsub.f32 %v647, %v737
        %v760 = vsub.f32 %v648, %v739
        %v761 = vsub.f32 %v649, %v741
        %v762 = vsub.f32 %v650, %v743
        %v763 = vsub.f32 %v651, %v745
        %v764 = vsub.f32 %v652, %v747
        %v765 = vsub.f32 %v653, %v749
        %766 = vst [vmem:[%s176] sm:$0xff] %v750
        %767 = vst [vmem:[%s176 + $0x8] sm:$0xff] %v751
        %768 = vst [vmem:[%s176 + $0x10] sm:$0xff] %v752
        %769 = vst [vmem:[%s176 + $0x18] sm:$0xff] %v753
        %770 = vst [vmem:[%s176 + $0x20] sm:$0xff] %v754
        %771 = vst [vmem:[%s176 + $0x28] sm:$0xff] %v755
        %772 = vst [vmem:[%s176 + $0x30] sm:$0xff] %v756
        %773 = vst [vmem:[%s176 + $0x38] sm:$0xff] %v757
        %774 = vst [vmem:[%s176 + $0x40] sm:$0xff] %v758
        %775 = vst [vmem:[%s176 + $0x48] sm:$0xff] %v759
        %776 = vst [vmem:[%s176 + $0x50] sm:$0xff] %v760
        %777 = vst [vmem:[%s176 + $0x58] sm:$0xff] %v761
        %778 = vst [vmem:[%s176 + $0x60] sm:$0xff] %v762
        %779 = vst [vmem:[%s176 + $0x68] sm:$0xff] %v763
        %780 = vst [vmem:[%s176 + $0x70] sm:$0xff] %v764
        %781 = vst [vmem:[%s176 + $0x78] sm:$0xff] %v765
      $region36: #{mlpgnn_forward.5} parent=27 // pred_fallthru
        _
      %s782 = smul.u32 16, %s17
      %p783 = scmp.lt.s32.totalorder %s782, 31
      %s784 = scalar_select %p783, %s782, 31
      %s785 = smul.addr %s784, 8
      %s786 = scalar_lea.vmem %s2, %s785
      // Predicated region
      $region37: #{mlpgnn_forward.5} parent=27 // pred_check
        %p787 = pneg %p92
      $region38: #{mlpgnn_forward.5} parent=27 // pred_check_branch
        %789 = sbr.rel (%p787) target = $region40
      $region39: #{mlpgnn_forward.5} parent=27 // pred_region
        %s790 = smul.u32 16, %s17
      $region40: #{mlpgnn_forward.5} parent=27 // pred_fallthru
        _
    $region28: #{mlpgnn_forward.5} parent=5 // pred_fallthru
      _
    %p791 = scmp.le.s32.totalorder 2, %s8
    // Predicated region
    $region41: #{mlpgnn_forward.5} parent=5 // pred_check
      %p792 = pneg %p791
    $region42: #{mlpgnn_forward.5} parent=5 // pred_check_branch
      %794 = sbr.rel (%p792) target = $region44
    $region43: #{mlpgnn_forward.5} parent=5 // pred_region
      %s795 = ssub.s32 %s8, 2
      // Predicated region
      $region45: #{mlpgnn_forward.5} parent=43 // pred_check
        %p796 = pneg %p98
      $region46: #{mlpgnn_forward.5} parent=43 // pred_check_branch
        %798 = sbr.rel (%p796) target = $region48
      $region47: #{mlpgnn_forward.5} parent=43 // pred_region
        %s799 = smul.u32 16, %s19
        %p800 = scmp.lt.s32.totalorder %s799, 31
        %s801 = scalar_select %p800, %s799, 31
        %s802 = smul.addr %s801, 8
        %s803 = scalar_lea.vmem %s2, %s802
      $region48: #{mlpgnn_forward.5} parent=43 // pred_fallthru
        _
    $region44: #{mlpgnn_forward.5} parent=5 // pred_fallthru
      _
  $region6: #{mlpgnn_forward.5} parent=0 // loop_footer
    %s12 = sadd.s32 1, %s8
  $region7: #{mlpgnn_forward.5} parent=0 // loop_footer_branch
    %7 = sbr.rel target = $region3
  $region8: #{mlpgnn_forward.5} parent=0 // loop_exit
    _

// kernel: mlpgnn_forward.4
$region0: #{mlpgnn_forward.4}
  #allocation0 [shape = 'u32[]', space=smem, size = 0x4, offset = 0x4, fixed_abs, tag = 'smem constant byte address 0x4 - core index']
  #allocation1 [shape = 'u32[72,128]{1,0:T(1,128)}', space=vmem, size = 0x9000, scoped, tag = 'internal scratch']
  #allocation2 [shape = 'f32[128,128]{1,0:T(8,128)}', space=vmem, size = 0x10000, scoped, tag = 'scratch operand']
  %s0 = inlined_call_operand.vmem [shape: bf16[256,256], index: 0, kind: input, shape index: {}]
  %s1 = inlined_call_operand.vmem [shape: bf16[256,128], index: 1, kind: input, shape index: {}]
  %s2 = inlined_call_operand.vmem [shape: bf16[128,128], index: 2, kind: input, shape index: {}]
  %s3 = inlined_call_operand.vmem [shape: bf16[256,128], index: 3, kind: output, shape index: {}]
  %s4 = sld [smem:[#allocation0]]
  $region53: #{mlpgnn_forward.4} parent=0
    _
  %s6 = ssub.s32 1, %s4
  %s7 = scalar_select 0, %s6, %s4
  loop: start=0, step=1, limit=4
  $region2: #{mlpgnn_forward.4} parent=0 // loop_pre_header
    _
  $region3: #{mlpgnn_forward.4} parent=0 // loop_header
    %s9 = sphi 0, %s13
    %p10 = scmp.ge.s32.totalorder %s9, 4
    %s16 = sphi 0, %s28
    %s17 = sphi 0, %s24
    %s18 = sphi 0, %s16
    %s19 = sphi 0, %s17
    %s20 = sphi 0, %s18
    %s21 = sphi 0, %s19
    %s33 = sphi 0, %s35
    %s36 = sphi 0, %s33
    %s37 = sphi 0, %s36
    %s53 = sphi 0, %s37
    %s57 = sphi 0, %s57
    %s59 = sphi 0, %s57
    %s60 = sphi 0, %s59
    %s74 = sphi 0, %s60
    %s78 = sphi 0, %s78
    %s80 = sphi 0, %s78
    %s81 = sphi 0, %s80
    %s95 = sphi 0, %s81
    %s101 = sphi 0, %s103
    %s104 = sphi 0, %s101
    %s105 = sphi 0, %s104
    %s121 = sphi 0, %s105
  $region4: #{mlpgnn_forward.4} parent=0 // loop_header_branch
    %12 = sbr.rel (%p10) target = $region8
  $region5: #{mlpgnn_forward.4} parent=0 // loop_body
    %s14 = ssub.s32 %s9, 1
    %s15 = ssub.s32 %s9, 2
    %s22 = sadd.s32 1, %s17
    %p23 = scmp.ge.s32.totalorder %s22, 1
    %s24 = scalar_select %p23, 0, %s22
    %s25 = sadd.s32 1, %s16
    %s26 = scalar_select %p23, %s25, %s16
    %p27 = scmp.ge.s32.totalorder %s26, 2
    %s28 = scalar_select %p27, 0, %s26
    %s29 = ssub.s32 %s16, %s28
    %s30 = ssub.s32 %s17, %s24
    %s31 = sor.u32 %s29, %s30
    %p32 = scmp.eq.s32.totalorder %s31, 0
    %s34 = sadd.s32 %s33, 1
    %s35 = scalar_select %p32, %s33, %s34
    %p38 = pneg %p32
    %p39 = scmp.eq.s32.totalorder %s9, 1
    %p40 = por %p38, %p39
    %p41 = scmp.ne.s32.totalorder %s33, %s36
    %p42 = scmp.eq.s32.totalorder %s9, 0
    %p43 = por %p41, %p42
    %p44 = scmp.ne.s32.totalorder %s33, %s36
    %p45 = scmp.eq.s32.totalorder %s14, 1
    %p46 = por %p44, %p45
    %p47 = scmp.ne.s32.totalorder %s36, %s37
    %p48 = scmp.eq.s32.totalorder %s14, 0
    %p49 = por %p47, %p48
    %p50 = scmp.ne.s32.totalorder %s36, %s37
    %p51 = scmp.eq.s32.totalorder %s15, 1
    %p52 = por %p50, %p51
    %p54 = scmp.ne.s32.totalorder %s37, %s53
    %p55 = scmp.eq.s32.totalorder %s15, 0
    %p56 = por %p54, %p55
    %s58 = sadd.s32 %s57, 1
    %p61 = scmp.eq.s32.totalorder %s9, 1
    %p62 = scmp.ne.s32.totalorder %s57, %s59
    %p63 = scmp.eq.s32.totalorder %s9, 0
    %p64 = por %p62, %p63
    %p65 = scmp.ne.s32.totalorder %s57, %s59
    %p66 = scmp.eq.s32.totalorder %s14, 1
    %p67 = por %p65, %p66
    %p68 = scmp.ne.s32.totalorder %s59, %s60
    %p69 = scmp.eq.s32.totalorder %s14, 0
    %p70 = por %p68, %p69
    %p71 = scmp.ne.s32.totalorder %s59, %s60
    %p72 = scmp.eq.s32.totalorder %s15, 1
    %p73 = por %p71, %p72
    %p75 = scmp.ne.s32.totalorder %s60, %s74
    %p76 = scmp.eq.s32.totalorder %s15, 0
    %p77 = por %p75, %p76
    %s79 = sadd.s32 %s78, 1
    %p82 = scmp.eq.s32.totalorder %s9, 1
    %p83 = scmp.ne.s32.totalorder %s78, %s80
    %p84 = scmp.eq.s32.totalorder %s9, 0
    %p85 = por %p83, %p84
    %p86 = scmp.ne.s32.totalorder %s78, %s80
    %p87 = scmp.eq.s32.totalorder %s14, 1
    %p88 = por %p86, %p87
    %p89 = scmp.ne.s32.totalorder %s80, %s81
    %p90 = scmp.eq.s32.totalorder %s14, 0
    %p91 = por %p89, %p90
    %p92 = scmp.ne.s32.totalorder %s80, %s81
    %p93 = scmp.eq.s32.totalorder %s15, 1
    %p94 = por %p92, %p93
    %p96 = scmp.ne.s32.totalorder %s81, %s95
    %p97 = scmp.eq.s32.totalorder %s15, 0
    %p98 = por %p96, %p97
    %s99 = ssub.s32 %s16, %s28
    %p100 = scmp.eq.s32.totalorder %s99, 0
    %s102 = sadd.s32 %s101, 1
    %s103 = scalar_select %p100, %s101, %s102
    %p106 = pneg %p100
    %p107 = scmp.eq.s32.totalorder %s9, 1
    %p108 = por %p106, %p107
    %p109 = scmp.ne.s32.totalorder %s101, %s104
    %p110 = scmp.eq.s32.totalorder %s9, 0
    %p111 = por %p109, %p110
    %p112 = scmp.ne.s32.totalorder %s101, %s104
    %p113 = scmp.eq.s32.totalorder %s14, 1
    %p114 = por %p112, %p113
    %p115 = scmp.ne.s32.totalorder %s104, %s105
    %p116 = scmp.eq.s32.totalorder %s14, 0
    %p117 = por %p115, %p116
    %p118 = scmp.ne.s32.totalorder %s104, %s105
    %p119 = scmp.eq.s32.totalorder %s15, 1
    %p120 = por %p118, %p119
    %p122 = scmp.ne.s32.totalorder %s105, %s121
    %p123 = scmp.eq.s32.totalorder %s15, 0
    %p124 = por %p122, %p123
    %p125 = scmp.le.s32.totalorder 1, %s9
    %p126 = scmp.lt.s32.totalorder %s9, 3
    %p127 = pnand %p125, %p126
    %p128 = pneg %p127
    // Predicated region
    $region9: #{mlpgnn_forward.4} parent=5 // pred_check
      _
    $region10: #{mlpgnn_forward.4} parent=5 // pred_check_branch
      %130 = sbr.rel (%p127) target = $region12
    $region11: #{mlpgnn_forward.4} parent=5 // pred_region
      %s131 = ssub.s32 %s9, 1
      // Predicated region
      $region13: #{mlpgnn_forward.4} parent=11 // pred_check
        %p132 = pneg %p70
      $region14: #{mlpgnn_forward.4} parent=11 // pred_check_branch
        %134 = sbr.rel (%p132) target = $region16
      $region15: #{mlpgnn_forward.4} parent=11 // pred_region
        _
      $region16: #{mlpgnn_forward.4} parent=11 // pred_fallthru
        _
      // Predicated region
      $region17: #{mlpgnn_forward.4} parent=11 // pred_check
        %p135 = pneg %p91
      $region18: #{mlpgnn_forward.4} parent=11 // pred_check_branch
        %137 = sbr.rel (%p135) target = $region20
      $region19: #{mlpgnn_forward.4} parent=11 // pred_region
        _
      $region20: #{mlpgnn_forward.4} parent=11 // pred_fallthru
        _
    $region12: #{mlpgnn_forward.4} parent=5 // pred_fallthru
      _
    %p138 = scmp.lt.s32.totalorder %s9, 2
    // Predicated region
    $region21: #{mlpgnn_forward.4} parent=5 // pred_check
      %p139 = pneg %p138
    $region22: #{mlpgnn_forward.4} parent=5 // pred_check_branch
      %141 = sbr.rel (%p139) target = $region24
    $region23: #{mlpgnn_forward.4} parent=5 // pred_region
      // Predicated region
      $region25: #{mlpgnn_forward.4} parent=23 // pred_check
        %p142 = pneg %p43
      $region26: #{mlpgnn_forward.4} parent=23 // pred_check_branch
        %144 = sbr.rel (%p142) target = $region28
      $region27: #{mlpgnn_forward.4} parent=23 // pred_region
        %s145 = smul.u32 16, %s16
        %s146 = smul.u32 2, %s17
        %p147 = scmp.lt.s32.totalorder %s145, 31
        %s148 = scalar_select %p147, %s145, 31
        %p149 = scmp.lt.s32.totalorder %s146, 1
        %s150 = scalar_select %p149, %s146, 1
        %s151 = smul.addr %s148, 2
        %s152 = sadd.s32 %s150, %s151
        %s153 = smul.addr %s152, 4
        %s154 = scalar_lea.vmem %s0, %s153
        %s155 = smul.u32 16, %s16
        %s156 = smul.u32 2, %s17
      $region28: #{mlpgnn_forward.4} parent=23 // pred_fallthru
        _
    $region24: #{mlpgnn_forward.4} parent=5 // pred_fallthru
      _
    %p157 = scmp.le.s32.totalorder 1, %s9
    %p158 = scmp.lt.s32.totalorder %s9, 3
    %p159 = pnand %p157, %p158
    %p160 = pneg %p159
    // Predicated region
    $region29: #{mlpgnn_forward.4} parent=5 // pred_check
      _
    $region30: #{mlpgnn_forward.4} parent=5 // pred_check_branch
      %162 = sbr.rel (%p159) target = $region32
    $region31: #{mlpgnn_forward.4} parent=5 // pred_region
      %s163 = ssub.s32 %s9, 1
      %s164 = smul.u32 16, %s18
      %s165 = smul.u32 2, %s19
      %p166 = scmp.lt.s32.totalorder %s164, 31
      %s167 = scalar_select %p166, %s164, 31
      %p168 = scmp.lt.s32.totalorder %s165, 1
      %s169 = scalar_select %p168, %s165, 1
      %s170 = smul.addr %s167, 2
      %s171 = sadd.s32 %s169, %s170
      %s172 = smul.addr %s171, 4
      %s173 = scalar_lea.vmem %s0, %s172
      %p174 = pneg %p49
      %p175 = pneg %p46
      %p176 = pneg %p70
      %p177 = pneg %p67
      %p178 = pneg %p91
      %p179 = pneg %p88
      %p180 = pneg %p117
      %p181 = pneg %p114
      %s182 = smul.u32 16, %s18
      %p183 = scmp.lt.s32.totalorder %s182, 31
      %s184 = scalar_select %p183, %s182, 31
      %s185 = smul.addr %s184, 4
      %s186 = scalar_lea.vmem %s3, %s185
      %s187 = smul.u32 16, %s18
      %s188 = smul.u32 2, %s19
      %p189 = scmp.lt.s32.totalorder %s187, 31
      %s190 = scalar_select %p189, %s187, 31
      %p191 = scmp.lt.s32.totalorder %s188, 1
      %s192 = scalar_select %p191, %s188, 1
      %s193 = smul.addr %s190, 2
      %s194 = sadd.s32 %s192, %s193
      %s195 = smul.addr %s194, 4
      %s196 = scalar_lea.vmem %s0, %s195
      %s197 = smul.u32 16, %s18
      %s198 = smul.u32 2, %s19
      %s199 = smul.u32 16, %s18
      %p200 = scmp.lt.s32.totalorder %s199, 31
      %s201 = scalar_select %p200, %s199, 31
      %s202 = smul.addr %s201, 4
      %s203 = scalar_lea.vmem %s3, %s202
      %s204 = smul.u32 16, %s18
      %p205 = scmp.eq.s32.totalorder %s19, 0
      // Predicated region
      $region33: #{mlpgnn_forward.4} parent=31 // pred_check
        %p206 = pneg %p205
      $region34: #{mlpgnn_forward.4} parent=31 // pred_check_branch
        %208 = sbr.rel (%p206) target = $region36
      $region35: #{mlpgnn_forward.4} parent=31 // pred_region
        %209 = vst [vmem:[#allocation2] sm:$0xff] 0.0
        %210 = vst [vmem:[#allocation2 + $0x8] sm:$0xff] 0.0
        %211 = vst [vmem:[#allocation2 + $0x10] sm:$0xff] 0.0
        %212 = vst [vmem:[#allocation2 + $0x18] sm:$0xff] 0.0
        %213 = vst [vmem:[#allocation2 + $0x20] sm:$0xff] 0.0
        %214 = vst [vmem:[#allocation2 + $0x28] sm:$0xff] 0.0
        %215 = vst [vmem:[#allocation2 + $0x30] sm:$0xff] 0.0
        %216 = vst [vmem:[#allocation2 + $0x38] sm:$0xff] 0.0
        %217 = vst [vmem:[#allocation2 + $0x40] sm:$0xff] 0.0
        %218 = vst [vmem:[#allocation2 + $0x48] sm:$0xff] 0.0
        %219 = vst [vmem:[#allocation2 + $0x50] sm:$0xff] 0.0
        %220 = vst [vmem:[#allocation2 + $0x58] sm:$0xff] 0.0
        %221 = vst [vmem:[#allocation2 + $0x60] sm:$0xff] 0.0
        %222 = vst [vmem:[#allocation2 + $0x68] sm:$0xff] 0.0
        %223 = vst [vmem:[#allocation2 + $0x70] sm:$0xff] 0.0
        %224 = vst [vmem:[#allocation2 + $0x78] sm:$0xff] 0.0
      $region36: #{mlpgnn_forward.4} parent=31 // pred_fallthru
        _
      %v225 = vld [vmem:[%s1] sm:$0xf]
      %v226 = vld [vmem:[%s1 + $0x4] sm:$0xf]
      %v227 = vld [vmem:[%s1 + $0x8] sm:$0xf]
      %v228 = vld [vmem:[%s1 + $0xc] sm:$0xf]
      %v229 = vld [vmem:[%s1 + $0x10] sm:$0xf]
      %v230 = vld [vmem:[%s1 + $0x14] sm:$0xf]
      %v231 = vld [vmem:[%s1 + $0x18] sm:$0xf]
      %v232 = vld [vmem:[%s1 + $0x1c] sm:$0xf]
      %v233 = vld [vmem:[%s1 + $0x20] sm:$0xf]
      %v234 = vld [vmem:[%s1 + $0x24] sm:$0xf]
      %v235 = vld [vmem:[%s1 + $0x28] sm:$0xf]
      %v236 = vld [vmem:[%s1 + $0x2c] sm:$0xf]
      %v237 = vld [vmem:[%s1 + $0x30] sm:$0xf]
      %v238 = vld [vmem:[%s1 + $0x34] sm:$0xf]
      %v239 = vld [vmem:[%s1 + $0x38] sm:$0xf]
      %v240 = vld [vmem:[%s1 + $0x3c] sm:$0xf]
      %v241 = vld [vmem:[%s1 + $0x40] sm:$0xf]
      %v242 = vld [vmem:[%s1 + $0x44] sm:$0xf]
      %v243 = vld [vmem:[%s1 + $0x48] sm:$0xf]
      %v244 = vld [vmem:[%s1 + $0x4c] sm:$0xf]
      %v245 = vld [vmem:[%s1 + $0x50] sm:$0xf]
      %v246 = vld [vmem:[%s1 + $0x54] sm:$0xf]
      %v247 = vld [vmem:[%s1 + $0x58] sm:$0xf]
      %v248 = vld [vmem:[%s1 + $0x5c] sm:$0xf]
      %v249 = vld [vmem:[%s1 + $0x60] sm:$0xf]
      %v250 = vld [vmem:[%s1 + $0x64] sm:$0xf]
      %v251 = vld [vmem:[%s1 + $0x68] sm:$0xf]
      %v252 = vld [vmem:[%s1 + $0x6c] sm:$0xf]
      %v253 = vld [vmem:[%s1 + $0x70] sm:$0xf]
      %v254 = vld [vmem:[%s1 + $0x74] sm:$0xf]
      %v255 = vld [vmem:[%s1 + $0x78] sm:$0xf]
      %v256 = vld [vmem:[%s1 + $0x7c] sm:$0xf]
      %v257 = vld [vmem:[#allocation2] sm:$0xff]
      %v258 = vld [vmem:[#allocation2 + $0x8] sm:$0xff]
      %v259 = vld [vmem:[#allocation2 + $0x10] sm:$0xff]
      %v260 = vld [vmem:[#allocation2 + $0x18] sm:$0xff]
      %v261 = vld [vmem:[#allocation2 + $0x20] sm:$0xff]
      %v262 = vld [vmem:[#allocation2 + $0x28] sm:$0xff]
      %v263 = vld [vmem:[#allocation2 + $0x30] sm:$0xff]
      %v264 = vld [vmem:[#allocation2 + $0x38] sm:$0xff]
      %v265 = vld [vmem:[#allocation2 + $0x40] sm:$0xff]
      %v266 = vld [vmem:[#allocation2 + $0x48] sm:$0xff]
      %v267 = vld [vmem:[#allocation2 + $0x50] sm:$0xff]
      %v268 = vld [vmem:[#allocation2 + $0x58] sm:$0xff]
      %v269 = vld [vmem:[#allocation2 + $0x60] sm:$0xff]
      %v270 = vld [vmem:[#allocation2 + $0x68] sm:$0xff]
      %v271 = vld [vmem:[#allocation2 + $0x70] sm:$0xff]
      %v272 = vld [vmem:[#allocation2 + $0x78] sm:$0xff]
      %v273 = vld [vmem:[%s196] sm:$0xff]
      %v274 = vld [vmem:[%s196 + $0x8] sm:$0xff]
      %v275 = vld [vmem:[%s196 + $0x10] sm:$0xff]
      %v276 = vld [vmem:[%s196 + $0x18] sm:$0xff]
      %v277 = vld [vmem:[%s196 + $0x20] sm:$0xff]
      %v278 = vld [vmem:[%s196 + $0x28] sm:$0xff]
      %v279 = vld [vmem:[%s196 + $0x30] sm:$0xff]
      %v280 = vld [vmem:[%s196 + $0x38] sm:$0xff]
      %v281 = vld [vmem:[%s196 + $0x40] sm:$0xff]
      %v282 = vld [vmem:[%s196 + $0x48] sm:$0xff]
      %v283 = vld [vmem:[%s196 + $0x50] sm:$0xff]
      %v284 = vld [vmem:[%s196 + $0x58] sm:$0xff]
      %v285 = vld [vmem:[%s196 + $0x60] sm:$0xff]
      %v286 = vld [vmem:[%s196 + $0x68] sm:$0xff]
      %v287 = vld [vmem:[%s196 + $0x70] sm:$0xff]
      %v288 = vld [vmem:[%s196 + $0x78] sm:$0xff]
      %v305 = vunpack.c.l.b16 %v273
      %v306 = vunpack.c.h.b16 %v273
      %v307 = vunpack.c.l.b16 %v274
      %v308 = vunpack.c.h.b16 %v274
      %v309 = vunpack.c.l.b16 %v275
      %v310 = vunpack.c.h.b16 %v275
      %v311 = vunpack.c.l.b16 %v276
      %v312 = vunpack.c.h.b16 %v276
      %v313 = vunpack.c.l.b16 %v277
      %v314 = vunpack.c.h.b16 %v277
      %v315 = vunpack.c.l.b16 %v278
      %v316 = vunpack.c.h.b16 %v278
      %v317 = vunpack.c.l.b16 %v279
      %v318 = vunpack.c.h.b16 %v279
      %v319 = vunpack.c.l.b16 %v280
      %v320 = vunpack.c.h.b16 %v280
      %v321 = vunpack.c.l.b16 %v281
      %v322 = vunpack.c.h.b16 %v281
      %v323 = vunpack.c.l.b16 %v282
      %v324 = vunpack.c.h.b16 %v282
      %v325 = vunpack.c.l.b16 %v283
      %v326 = vunpack.c.h.b16 %v283
      %v327 = vunpack.c.l.b16 %v284
      %v328 = vunpack.c.h.b16 %v284
      %v329 = vunpack.c.l.b16 %v285
      %v330 = vunpack.c.h.b16 %v285
      %v331 = vunpack.c.l.b16 %v286
      %v332 = vunpack.c.h.b16 %v286
      %v333 = vunpack.c.l.b16 %v287
      %v334 = vunpack.c.h.b16 %v287
      %v335 = vunpack.c.l.b16 %v288
      %v336 = vunpack.c.h.b16 %v288
      %v337 = vpack.c.b16 %v307, %v305
      %v338 = vpack.c.b16 %v308, %v306
      %v339 = vpack.c.b16 %v311, %v309
      %v340 = vpack.c.b16 %v312, %v310
      %v341 = vpack.c.b16 %v315, %v313
      %v342 = vpack.c.b16 %v316, %v314
      %v343 = vpack.c.b16 %v319, %v317
      %v344 = vpack.c.b16 %v320, %v318
      %v345 = vpack.c.b16 %v323, %v321
      %v346 = vpack.c.b16 %v324, %v322
      %v347 = vpack.c.b16 %v327, %v325
      %v348 = vpack.c.b16 %v328, %v326
      %v349 = vpack.c.b16 %v331, %v329
      %v350 = vpack.c.b16 %v332, %v330
      %v351 = vpack.c.b16 %v335, %v333
      %v352 = vpack.c.b16 %v336, %v334
      %v401 = vunpack.c.l.b16 %v225
      %v402 = vunpack.c.l.b16 %v226
      %v403 = vunpack.c.l.b16 %v227
      %v404 = vunpack.c.l.b16 %v228
      %v405 = vunpack.c.l.b16 %v229
      %v406 = vunpack.c.l.b16 %v230
      %v407 = vunpack.c.l.b16 %v231
      %v408 = vunpack.c.l.b16 %v232
      %v409 = vunpack.c.l.b16 %v233
      %v410 = vunpack.c.l.b16 %v234
      %v411 = vunpack.c.l.b16 %v235
      %v412 = vunpack.c.l.b16 %v236
      %v413 = vunpack.c.l.b16 %v237
      %v414 = vunpack.c.l.b16 %v238
      %v415 = vunpack.c.l.b16 %v239
      %v416 = vunpack.c.l.b16 %v240
      %v417 = vunpack.c.l.b16 %v241
      %v418 = vunpack.c.l.b16 %v242
      %v419 = vunpack.c.l.b16 %v243
      %v420 = vunpack.c.l.b16 %v244
      %v421 = vunpack.c.l.b16 %v245
      %v422 = vunpack.c.l.b16 %v246
      %v423 = vunpack.c.l.b16 %v247
      %v424 = vunpack.c.l.b16 %v248
      %v425 = vunpack.c.l.b16 %v249
      %v426 = vunpack.c.l.b16 %v250
      %v427 = vunpack.c.l.b16 %v251
      %v428 = vunpack.c.l.b16 %v252
      %v429 = vunpack.c.l.b16 %v253
      %v430 = vunpack.c.l.b16 %v254
      %v431 = vunpack.c.l.b16 %v255
      %v432 = vunpack.c.l.b16 %v256
      %v433 = vpack.c.b16 %v402, %v401
      %v434 = vpack.c.b16 %v404, %v403
      %v435 = vpack.c.b16 %v406, %v405
      %v436 = vpack.c.b16 %v408, %v407
      %v437 = vpack.c.b16 %v410, %v409
      %v438 = vpack.c.b16 %v412, %v411
      %v439 = vpack.c.b16 %v414, %v413
      %v440 = vpack.c.b16 %v416, %v415
      %v441 = vpack.c.b16 %v418, %v417
      %v442 = vpack.c.b16 %v420, %v419
      %v443 = vpack.c.b16 %v422, %v421
      %v444 = vpack.c.b16 %v424, %v423
      %v445 = vpack.c.b16 %v426, %v425
      %v446 = vpack.c.b16 %v428, %v427
      %v447 = vpack.c.b16 %v430, %v429
      %v448 = vpack.c.b16 %v432, %v431
      %465 = vmatpush.bf16.msra.mxu0 %v440
      %466 = vmatpush.bf16.msra.mxu0 %v439
      %467 = vmatpush.bf16.msra.mxu0 %v438
      %468 = vmatpush.bf16.msra.mxu0 %v437
      %469 = vmatpush.bf16.msra.mxu0 %v436
      %470 = vmatpush.bf16.msra.mxu0 %v435
      %471 = vmatpush.bf16.msra.mxu0 %v434
      %472 = vmatpush.bf16.msra.mxu0 %v433
      %473 = vmatmul.bf16.gmra.mxu0 %v337
      %v474 = vpop.f32.mrf.mxu0
      %v475 = vadd.f32 0.0, %v474
      %v476 = vpop.f32.mrf.mxu0
      %v477 = vadd.f32 0.0, %v476
      %478 = vmatmul.bf16.gmra.mxu0 %v339
      %v479 = vpop.f32.mrf.mxu0
      %v480 = vadd.f32 0.0, %v479
      %v481 = vpop.f32.mrf.mxu0
      %v482 = vadd.f32 0.0, %v481
      %483 = vmatmul.bf16.gmra.mxu0 %v341
      %v484 = vpop.f32.mrf.mxu0
      %v485 = vadd.f32 0.0, %v484
      %v486 = vpop.f32.mrf.mxu0
      %v487 = vadd.f32 0.0, %v486
      %488 = vmatmul.bf16.gmra.mxu0 %v343
      %v489 = vpop.f32.mrf.mxu0
      %v490 = vadd.f32 0.0, %v489
      %v491 = vpop.f32.mrf.mxu0
      %v492 = vadd.f32 0.0, %v491
      %493 = vmatmul.bf16.gmra.mxu0 %v345
      %v494 = vpop.f32.mrf.mxu0
      %v495 = vadd.f32 0.0, %v494
      %v496 = vpop.f32.mrf.mxu0
      %v497 = vadd.f32 0.0, %v496
      %498 = vmatmul.bf16.gmra.mxu0 %v347
      %v499 = vpop.f32.mrf.mxu0
      %v500 = vadd.f32 0.0, %v499
      %v501 = vpop.f32.mrf.mxu0
      %v502 = vadd.f32 0.0, %v501
      %503 = vmatmul.bf16.gmra.mxu0 %v349
      %v504 = vpop.f32.mrf.mxu0
      %v505 = vadd.f32 0.0, %v504
      %v506 = vpop.f32.mrf.mxu0
      %v507 = vadd.f32 0.0, %v506
      %508 = vmatmul.bf16.gmra.mxu0 %v351
      %v509 = vpop.f32.mrf.mxu0
      %v510 = vadd.f32 0.0, %v509
      %v511 = vpop.f32.mrf.mxu0
      %v512 = vadd.f32 0.0, %v511
      %513 = vdwg.mxu0
      %514 = vmatpush.bf16.msra.mxu0 %v448
      %515 = vmatpush.bf16.msra.mxu0 %v447
      %516 = vmatpush.bf16.msra.mxu0 %v446
      %517 = vmatpush.bf16.msra.mxu0 %v445
      %518 = vmatpush.bf16.msra.mxu0 %v444
      %519 = vmatpush.bf16.msra.mxu0 %v443
      %520 = vmatpush.bf16.msra.mxu0 %v442
      %521 = vmatpush.bf16.msra.mxu0 %v441
      %522 = vmatmul.bf16.gmra.mxu0 %v338
      %v523 = vpop.f32.mrf.mxu0
      %v524 = vadd.f32 %v475, %v523
      %v525 = vpop.f32.mrf.mxu0
      %v526 = vadd.f32 %v477, %v525
      %527 = vmatmul.bf16.gmra.mxu0 %v340
      %v528 = vpop.f32.mrf.mxu0
      %v529 = vadd.f32 %v480, %v528
      %v530 = vpop.f32.mrf.mxu0
      %v531 = vadd.f32 %v482, %v530
      %532 = vmatmul.bf16.gmra.mxu0 %v342
      %v533 = vpop.f32.mrf.mxu0
      %v534 = vadd.f32 %v485, %v533
      %v535 = vpop.f32.mrf.mxu0
      %v536 = vadd.f32 %v487, %v535
      %537 = vmatmul.bf16.gmra.mxu0 %v344
      %v538 = vpop.f32.mrf.mxu0
      %v539 = vadd.f32 %v490, %v538
      %v540 = vpop.f32.mrf.mxu0
      %v541 = vadd.f32 %v492, %v540
      %542 = vmatmul.bf16.gmra.mxu0 %v346
      %v543 = vpop.f32.mrf.mxu0
      %v544 = vadd.f32 %v495, %v543
      %v545 = vpop.f32.mrf.mxu0
      %v546 = vadd.f32 %v497, %v545
      %547 = vmatmul.bf16.gmra.mxu0 %v348
      %v548 = vpop.f32.mrf.mxu0
      %v549 = vadd.f32 %v500, %v548
      %v550 = vpop.f32.mrf.mxu0
      %v551 = vadd.f32 %v502, %v550
      %552 = vmatmul.bf16.gmra.mxu0 %v350
      %v553 = vpop.f32.mrf.mxu0
      %v554 = vadd.f32 %v505, %v553
      %v555 = vpop.f32.mrf.mxu0
      %v556 = vadd.f32 %v507, %v555
      %557 = vmatmul.bf16.gmra.mxu0 %v352
      %v558 = vpop.f32.mrf.mxu0
      %v559 = vadd.f32 %v510, %v558
      %v560 = vpop.f32.mrf.mxu0
      %v561 = vadd.f32 %v512, %v560
      %562 = vdwg.mxu0
      %v563 = vadd.f32 %v257, %v524
      %v564 = vadd.f32 %v258, %v526
      %v565 = vadd.f32 %v259, %v529
      %v566 = vadd.f32 %v260, %v531
      %v567 = vadd.f32 %v261, %v534
      %v568 = vadd.f32 %v262, %v536
      %v569 = vadd.f32 %v263, %v539
      %v570 = vadd.f32 %v264, %v541
      %v571 = vadd.f32 %v265, %v544
      %v572 = vadd.f32 %v266, %v546
      %v573 = vadd.f32 %v267, %v549
      %v574 = vadd.f32 %v268, %v551
      %v575 = vadd.f32 %v269, %v554
      %v576 = vadd.f32 %v270, %v556
      %v577 = vadd.f32 %v271, %v559
      %v578 = vadd.f32 %v272, %v561
      %579 = vst [vmem:[#allocation2] sm:$0xff] %v563
      %580 = vst [vmem:[#allocation2 + $0x8] sm:$0xff] %v564
      %581 = vst [vmem:[#allocation2 + $0x10] sm:$0xff] %v565
      %582 = vst [vmem:[#allocation2 + $0x18] sm:$0xff] %v566
      %583 = vst [vmem:[#allocation2 + $0x20] sm:$0xff] %v567
      %584 = vst [vmem:[#allocation2 + $0x28] sm:$0xff] %v568
      %585 = vst [vmem:[#allocation2 + $0x30] sm:$0xff] %v569
      %586 = vst [vmem:[#allocation2 + $0x38] sm:$0xff] %v570
      %587 = vst [vmem:[#allocation2 + $0x40] sm:$0xff] %v571
      %588 = vst [vmem:[#allocation2 + $0x48] sm:$0xff] %v572
      %589 = vst [vmem:[#allocation2 + $0x50] sm:$0xff] %v573
      %590 = vst [vmem:[#allocation2 + $0x58] sm:$0xff] %v574
      %591 = vst [vmem:[#allocation2 + $0x60] sm:$0xff] %v575
      %592 = vst [vmem:[#allocation2 + $0x68] sm:$0xff] %v576
      %593 = vst [vmem:[#allocation2 + $0x70] sm:$0xff] %v577
      %594 = vst [vmem:[#allocation2 + $0x78] sm:$0xff] %v578
      // Predicated region
      $region37: #{mlpgnn_forward.4} parent=31 // pred_check
        %p595 = pneg %p205
      $region38: #{mlpgnn_forward.4} parent=31 // pred_check_branch
        %597 = sbr.rel (%p595) target = $region40
      $region39: #{mlpgnn_forward.4} parent=31 // pred_region
        %v598 = vld [vmem:[#allocation2] sm:$0xff]
        %v599 = vld [vmem:[#allocation2 + $0x8] sm:$0xff]
        %v600 = vld [vmem:[#allocation2 + $0x10] sm:$0xff]
        %v601 = vld [vmem:[#allocation2 + $0x18] sm:$0xff]
        %v602 = vld [vmem:[#allocation2 + $0x20] sm:$0xff]
        %v603 = vld [vmem:[#allocation2 + $0x28] sm:$0xff]
        %v604 = vld [vmem:[#allocation2 + $0x30] sm:$0xff]
        %v605 = vld [vmem:[#allocation2 + $0x38] sm:$0xff]
        %v606 = vld [vmem:[#allocation2 + $0x40] sm:$0xff]
        %v607 = vld [vmem:[#allocation2 + $0x48] sm:$0xff]
        %v608 = vld [vmem:[#allocation2 + $0x50] sm:$0xff]
        %v609 = vld [vmem:[#allocation2 + $0x58] sm:$0xff]
        %v610 = vld [vmem:[#allocation2 + $0x60] sm:$0xff]
        %v611 = vld [vmem:[#allocation2 + $0x68] sm:$0xff]
        %v612 = vld [vmem:[#allocation2 + $0x70] sm:$0xff]
        %v613 = vld [vmem:[#allocation2 + $0x78] sm:$0xff]
        %v614 = vmax.f32 %v598, 0.0
        %v615 = vmax.f32 %v599, 0.0
        %v616 = vmax.f32 %v600, 0.0
        %v617 = vmax.f32 %v601, 0.0
        %v618 = vmax.f32 %v602, 0.0
        %v619 = vmax.f32 %v603, 0.0
        %v620 = vmax.f32 %v604, 0.0
        %v621 = vmax.f32 %v605, 0.0
        %v622 = vmax.f32 %v606, 0.0
        %v623 = vmax.f32 %v607, 0.0
        %v624 = vmax.f32 %v608, 0.0
        %v625 = vmax.f32 %v609, 0.0
        %v626 = vmax.f32 %v610, 0.0
        %v627 = vmax.f32 %v611, 0.0
        %v628 = vmax.f32 %v612, 0.0
        %v629 = vmax.f32 %v613, 0.0
        %v630 = vpack.c.bf16 %v615, %v614
        %v631 = vpack.c.bf16 %v617, %v616
        %v632 = vpack.c.bf16 %v619, %v618
        %v633 = vpack.c.bf16 %v621, %v620
        %v634 = vpack.c.bf16 %v623, %v622
        %v635 = vpack.c.bf16 %v625, %v624
        %v636 = vpack.c.bf16 %v627, %v626
        %v637 = vpack.c.bf16 %v629, %v628
        %v638 = vld [vmem:[%s2] sm:$0xf]
        %v639 = vld [vmem:[%s2 + $0x4] sm:$0xf]
        %v640 = vld [vmem:[%s2 + $0x8] sm:$0xf]
        %v641 = vld [vmem:[%s2 + $0xc] sm:$0xf]
        %v642 = vld [vmem:[%s2 + $0x10] sm:$0xf]
        %v643 = vld [vmem:[%s2 + $0x14] sm:$0xf]
        %v644 = vld [vmem:[%s2 + $0x18] sm:$0xf]
        %v645 = vld [vmem:[%s2 + $0x1c] sm:$0xf]
        %v646 = vld [vmem:[%s2 + $0x20] sm:$0xf]
        %v647 = vld [vmem:[%s2 + $0x24] sm:$0xf]
        %v648 = vld [vmem:[%s2 + $0x28] sm:$0xf]
        %v649 = vld [vmem:[%s2 + $0x2c] sm:$0xf]
        %v650 = vld [vmem:[%s2 + $0x30] sm:$0xf]
        %v651 = vld [vmem:[%s2 + $0x34] sm:$0xf]
        %v652 = vld [vmem:[%s2 + $0x38] sm:$0xf]
        %v653 = vld [vmem:[%s2 + $0x3c] sm:$0xf]
        %v670 = vunpack.c.l.b16 %v638
        %v671 = vunpack.c.l.b16 %v639
        %v672 = vunpack.c.l.b16 %v640
        %v673 = vunpack.c.l.b16 %v641
        %v674 = vunpack.c.l.b16 %v642
        %v675 = vunpack.c.l.b16 %v643
        %v676 = vunpack.c.l.b16 %v644
        %v677 = vunpack.c.l.b16 %v645
        %v678 = vunpack.c.l.b16 %v646
        %v679 = vunpack.c.l.b16 %v647
        %v680 = vunpack.c.l.b16 %v648
        %v681 = vunpack.c.l.b16 %v649
        %v682 = vunpack.c.l.b16 %v650
        %v683 = vunpack.c.l.b16 %v651
        %v684 = vunpack.c.l.b16 %v652
        %v685 = vunpack.c.l.b16 %v653
        %v686 = vpack.c.b16 %v671, %v670
        %v687 = vpack.c.b16 %v673, %v672
        %v688 = vpack.c.b16 %v675, %v674
        %v689 = vpack.c.b16 %v677, %v676
        %v690 = vpack.c.b16 %v679, %v678
        %v691 = vpack.c.b16 %v681, %v680
        %v692 = vpack.c.b16 %v683, %v682
        %v693 = vpack.c.b16 %v685, %v684
        %702 = vmatpush.bf16.msra.mxu0 %v693
        %703 = vmatpush.bf16.msra.mxu0 %v692
        %704 = vmatpush.bf16.msra.mxu0 %v691
        %705 = vmatpush.bf16.msra.mxu0 %v690
        %706 = vmatpush.bf16.msra.mxu0 %v689
        %707 = vmatpush.bf16.msra.mxu0 %v688
        %708 = vmatpush.bf16.msra.mxu0 %v687
        %709 = vmatpush.bf16.msra.mxu0 %v686
        %710 = vmatmul.bf16.gmra.mxu0 %v630
        %v711 = vpop.f32.mrf.mxu0
        %v712 = vadd.f32 0.0, %v711
        %v713 = vpop.f32.mrf.mxu0
        %v714 = vadd.f32 0.0, %v713
        %715 = vmatmul.bf16.gmra.mxu0 %v631
        %v716 = vpop.f32.mrf.mxu0
        %v717 = vadd.f32 0.0, %v716
        %v718 = vpop.f32.mrf.mxu0
        %v719 = vadd.f32 0.0, %v718
        %720 = vmatmul.bf16.gmra.mxu0 %v632
        %v721 = vpop.f32.mrf.mxu0
        %v722 = vadd.f32 0.0, %v721
        %v723 = vpop.f32.mrf.mxu0
        %v724 = vadd.f32 0.0, %v723
        %725 = vmatmul.bf16.gmra.mxu0 %v633
        %v726 = vpop.f32.mrf.mxu0
        %v727 = vadd.f32 0.0, %v726
        %v728 = vpop.f32.mrf.mxu0
        %v729 = vadd.f32 0.0, %v728
        %730 = vmatmul.bf16.gmra.mxu0 %v634
        %v731 = vpop.f32.mrf.mxu0
        %v732 = vadd.f32 0.0, %v731
        %v733 = vpop.f32.mrf.mxu0
        %v734 = vadd.f32 0.0, %v733
        %735 = vmatmul.bf16.gmra.mxu0 %v635
        %v736 = vpop.f32.mrf.mxu0
        %v737 = vadd.f32 0.0, %v736
        %v738 = vpop.f32.mrf.mxu0
        %v739 = vadd.f32 0.0, %v738
        %740 = vmatmul.bf16.gmra.mxu0 %v636
        %v741 = vpop.f32.mrf.mxu0
        %v742 = vadd.f32 0.0, %v741
        %v743 = vpop.f32.mrf.mxu0
        %v744 = vadd.f32 0.0, %v743
        %745 = vmatmul.bf16.gmra.mxu0 %v637
        %v746 = vpop.f32.mrf.mxu0
        %v747 = vadd.f32 0.0, %v746
        %v748 = vpop.f32.mrf.mxu0
        %v749 = vadd.f32 0.0, %v748
        %750 = vdwg.mxu0
        %v751 = vpack.c.bf16 %v712, %v712
        %v752 = vpack.c.bf16 %v714, %v714
        %v753 = vpack.c.bf16 %v717, %v717
        %v754 = vpack.c.bf16 %v719, %v719
        %v755 = vpack.c.bf16 %v722, %v722
        %v756 = vpack.c.bf16 %v724, %v724
        %v757 = vpack.c.bf16 %v727, %v727
        %v758 = vpack.c.bf16 %v729, %v729
        %v759 = vpack.c.bf16 %v732, %v732
        %v760 = vpack.c.bf16 %v734, %v734
        %v761 = vpack.c.bf16 %v737, %v737
        %v762 = vpack.c.bf16 %v739, %v739
        %v763 = vpack.c.bf16 %v742, %v742
        %v764 = vpack.c.bf16 %v744, %v744
        %v765 = vpack.c.bf16 %v747, %v747
        %v766 = vpack.c.bf16 %v749, %v749
        %767 = vst [vmem:[%s203] sm:$0xf] %v751
        %768 = vst [vmem:[%s203 + $0x4] sm:$0xf] %v752
        %769 = vst [vmem:[%s203 + $0x8] sm:$0xf] %v753
        %770 = vst [vmem:[%s203 + $0xc] sm:$0xf] %v754
        %771 = vst [vmem:[%s203 + $0x10] sm:$0xf] %v755
        %772 = vst [vmem:[%s203 + $0x14] sm:$0xf] %v756
        %773 = vst [vmem:[%s203 + $0x18] sm:$0xf] %v757
        %774 = vst [vmem:[%s203 + $0x1c] sm:$0xf] %v758
        %775 = vst [vmem:[%s203 + $0x20] sm:$0xf] %v759
        %776 = vst [vmem:[%s203 + $0x24] sm:$0xf] %v760
        %777 = vst [vmem:[%s203 + $0x28] sm:$0xf] %v761
        %778 = vst [vmem:[%s203 + $0x2c] sm:$0xf] %v762
        %779 = vst [vmem:[%s203 + $0x30] sm:$0xf] %v763
        %780 = vst [vmem:[%s203 + $0x34] sm:$0xf] %v764
        %781 = vst [vmem:[%s203 + $0x38] sm:$0xf] %v765
        %782 = vst [vmem:[%s203 + $0x3c] sm:$0xf] %v766
      $region40: #{mlpgnn_forward.4} parent=31 // pred_fallthru
        _
      %s783 = smul.u32 16, %s18
      %p784 = scmp.lt.s32.totalorder %s783, 31
      %s785 = scalar_select %p784, %s783, 31
      %s786 = smul.addr %s785, 4
      %s787 = scalar_lea.vmem %s3, %s786
      // Predicated region
      $region41: #{mlpgnn_forward.4} parent=31 // pred_check
        %p788 = pneg %p114
      $region42: #{mlpgnn_forward.4} parent=31 // pred_check_branch
        %790 = sbr.rel (%p788) target = $region44
      $region43: #{mlpgnn_forward.4} parent=31 // pred_region
        %s791 = smul.u32 16, %s18
      $region44: #{mlpgnn_forward.4} parent=31 // pred_fallthru
        _
    $region32: #{mlpgnn_forward.4} parent=5 // pred_fallthru
      _
    %p792 = scmp.le.s32.totalorder 2, %s9
    // Predicated region
    $region45: #{mlpgnn_forward.4} parent=5 // pred_check
      %p793 = pneg %p792
    $region46: #{mlpgnn_forward.4} parent=5 // pred_check_branch
      %795 = sbr.rel (%p793) target = $region48
    $region47: #{mlpgnn_forward.4} parent=5 // pred_region
      %s796 = ssub.s32 %s9, 2
      // Predicated region
      $region49: #{mlpgnn_forward.4} parent=47 // pred_check
        %p797 = pneg %p120
      $region50: #{mlpgnn_forward.4} parent=47 // pred_check_branch
        %799 = sbr.rel (%p797) target = $region52
      $region51: #{mlpgnn_forward.4} parent=47 // pred_region
        %s800 = smul.u32 16, %s20
        %p801 = scmp.lt.s32.totalorder %s800, 31
        %s802 = scalar_select %p801, %s800, 31
        %s803 = smul.addr %s802, 4
        %s804 = scalar_lea.vmem %s3, %s803
      $region52: #{mlpgnn_forward.4} parent=47 // pred_fallthru
        _
    $region48: #{mlpgnn_forward.4} parent=5 // pred_fallthru
      _
  $region6: #{mlpgnn_forward.4} parent=0 // loop_footer
    %s13 = sadd.s32 1, %s9
  $region7: #{mlpgnn_forward.4} parent=0 // loop_footer_branch
    %8 = sbr.rel target = $region3
  $region8: #{mlpgnn_forward.4} parent=0 // loop_exit
    _

</llo_original>
